<compile_context>
chip_gen: v6e
topology: v6e:2x2x1
jax: 0.10.0
libtpu: 0.0.40
codegen_flags: <defaults>
</compile_context>

<pallas_src>
import functools
import math

import jax
import jax.numpy as jnp
from jax.experimental import pallas as pl
from jax.experimental.pallas import tpu as pltpu


# ----------------------------------------------------------------------------
# generation-aware sizing helpers
# ----------------------------------------------------------------------------

def _vmem_capacity_bytes():
    try:
        return int(pltpu.get_tpu_info().vmem_capacity_bytes)
    except Exception:
        return 64 << 20          # conservative (v7x-sized) fallback


_VMEM_CAP = _vmem_capacity_bytes()
_BIG_VMEM = _VMEM_CAP >= (100 << 20)          # v5e/v6e: 128 MiB, v7x: 64 MiB
_LIN_ROW_TARGET = 1024 if _BIG_VMEM else 512  # fewer weight re-streams on v5e/v6e
_MLP_ROW_TARGET = 512 if _BIG_VMEM else 256   # keep fused-MLP resident set < 64 MiB
_LANE_TARGET = 512


def _compiler_params(dimension_semantics, block_bytes):
    # VMEM limit derived from the actual per-step footprint, clamped to ~75%
    # of this generation's physical VMEM (never 96 MiB on a 64 MiB v7x core).
    cap = int(0.75 * _VMEM_CAP)
    est = int(2.5 * block_bytes) + (2 << 20)
    limit = min(max(est, 32 << 20), cap)
    return pltpu.CompilerParams(
        dimension_semantics=dimension_semantics,
        vmem_limit_bytes=limit,
    )


def _pick_tile(dim, target, granularities):
    """Largest tile <= target that divides `dim` and is a multiple of one of
    `granularities` (tried in order, e.g. (256, 128) so v6e/v7x MXU-friendly
    tiles are preferred).  Small dims use the full dim (always a legal block).
    Callers pad dims that are large *and* badly aligned before tiling."""
    if dim <= target:
        return dim
    for g in granularities:
        if dim % g == 0:
            t = (target // g) * g
            while t >= g:
                if dim % t == 0:
                    return t
                t -= g
    return dim


def _round_up(x, m):
    return ((x + m - 1) // m) * m


def _pad_axis(a, axis, new_size):
    if a.shape[axis] == new_size:
        return a
    pads = [(0, 0)] * a.ndim
    pads[axis] = (0, new_size - a.shape[axis])
    return jnp.pad(a, pads)


def _gelu_tanh(x):
    # PyTorch GELU(approximate='tanh').
    c = math.sqrt(2.0 / math.pi)
    return 0.5 * x * (1.0 + jnp.tanh(c * (x + 0.044715 * x * x * x)))


# ----------------------------------------------------------------------------
# Fused residual-add + LayerNorm kernel
# ----------------------------------------------------------------------------

def add_layernorm_kernel(a_ref, b_ref, g_ref, beta_ref, s_ref, ln_ref, *, eps):
    s = a_ref[...].astype(jnp.float32) + b_ref[...].astype(jnp.float32)
    s_ref[...] = s.astype(s_ref.dtype)
    mu = jnp.mean(s, axis=-1, keepdims=True)
    var = jnp.mean(jnp.square(s - mu), axis=-1, keepdims=True)
    y = (s - mu) * jax.lax.rsqrt(var + eps)
    ln_ref[...] = (y * g_ref[...].astype(jnp.float32)
                   + beta_ref[...].astype(jnp.float32)).astype(ln_ref.dtype)


def add_layernorm_pallas(a2d, b2d, gamma, beta, *, eps=1e-5, tile_m=None):
    """Returns (a + b, LayerNorm(a + b)) in one pass over HBM."""
    M, C = a2d.shape
    tile_m = tile_m or _pick_tile(M, _LIN_ROW_TARGET, (8,))
    assert M % tile_m == 0

    itm = jnp.dtype(a2d.dtype).itemsize
    block_bytes = 4 * tile_m * C * itm + 2 * C * itm + tile_m * C * 4

    row_spec = pl.BlockSpec((tile_m, C), lambda i: (i, 0))
    vec_spec = pl.BlockSpec((1, C), lambda i: (0, 0))
    s, ln = pl.pallas_call(
        functools.partial(add_layernorm_kernel, eps=eps),
        out_shape=(jax.ShapeDtypeStruct((M, C), a2d.dtype),
                   jax.ShapeDtypeStruct((M, C), a2d.dtype)),
        grid_spec=pltpu.PrefetchScalarGridSpec(
            num_scalar_prefetch=0,
            grid=(M // tile_m,),
            in_specs=[row_spec, row_spec, vec_spec, vec_spec],
            out_specs=[row_spec, row_spec],
        ),
        compiler_params=_compiler_params(("parallel",), block_bytes),
    )(a2d, b2d, gamma.reshape(1, C), beta.reshape(1, C))
    return s, ln


# ----------------------------------------------------------------------------
# K-tiled Linear (y = x @ W + b), optional transposed RHS for the tied lm_head
# ----------------------------------------------------------------------------

def linear_kernel(x_ref, w_ref, b_ref, o_ref, acc_ref, *, transpose_rhs):
    k = pl.program_id(2)

    @pl.when(k == 0)
    def _():
        acc_ref[...] = jnp.zeros_like(acc_ref)

    if transpose_rhs:
        acc_ref[...] += jax.lax.dot_general(
            x_ref[...], w_ref[...], (((1,), (1,)), ((), ())),
            preferred_element_type=jnp.float32)
    else:
        acc_ref[...] += jnp.dot(x_ref[...], w_ref[...],
                                preferred_element_type=jnp.float32)

    @pl.when(k == pl.num_programs(2) - 1)
    def _():
        o_ref[...] = (acc_ref[...]
                      + b_ref[...].astype(jnp.float32)).astype(o_ref.dtype)


def linear_pallas(x2d, w, b=None, *, transpose_rhs=False, out_dtype=None,
                  tile_m=None, tile_n=None, tile_k=None):
    """y = x @ W + b.  W is [K, N], or [N, K] when transpose_rhs=True (used by
    the tied lm_head so params['wte'] is consumed directly, no wte.T pass)."""
    M, K = x2d.shape
    N, K2 = (w.shape if transpose_rhs else (w.shape[1], w.shape[0]))
    assert K == K2
    out_dtype = out_dtype or x2d.dtype
    if b is None:
        b = jnp.zeros((N,), dtype=w.dtype)

    # Pad large badly-aligned dims (e.g. vocab 50257 -> 50304) instead of
    # falling back to a VMEM-busting full-dim block.
    Mp = M if (M <= _LIN_ROW_TARGET or M % 8 == 0) else _round_up(M, 8)
    Np = N if (N <= _LANE_TARGET or N % 128 == 0) else _round_up(N, 128)
    Kp = K if (K <= _LANE_TARGET or K % 128 == 0) else _round_up(K, 128)
    xp = _pad_axis(_pad_axis(x2d, 0, Mp), 1, Kp)
    if transpose_rhs:
        wp = _pad_axis(_pad_axis(w, 0, Np), 1, Kp)
    else:
        wp = _pad_axis(_pad_axis(w, 0, Kp), 1, Np)
    bp = _pad_axis(b.reshape(1, N), 1, Np)

    tile_m = tile_m or _pick_tile(Mp, _LIN_ROW_TARGET, (8,))
    tile_n = tile_n or _pick_tile(Np, _LANE_TARGET, (256, 128))
    tile_k = tile_k or _pick_tile(Kp, _LANE_TARGET, (256, 128))
    assert Mp % tile_m == 0 and Np % tile_n == 0 and Kp % tile_k == 0

    itx = jnp.dtype(xp.dtype).itemsize
    itw = jnp.dtype(wp.dtype).itemsize
    block_bytes = (tile_m * tile_k * itx + tile_k * tile_n * itw + tile_n * itw
                   + tile_m * tile_n * jnp.dtype(out_dtype).itemsize
                   + tile_m * tile_n * 4)

    if transpose_rhs:
        w_spec = pl.BlockSpec((tile_n, tile_k), lambda i, j, k: (j, k))
    else:
        w_spec = pl.BlockSpec((tile_k, tile_n), lambda i, j, k: (k, j))

    out = pl.pallas_call(
        functools.partial(linear_kernel, transpose_rhs=transpose_rhs),
        out_shape=jax.ShapeDtypeStruct((Mp, Np), out_dtype),
        grid_spec=pltpu.PrefetchScalarGridSpec(
            num_scalar_prefetch=0,
            grid=(Mp // tile_m, Np // tile_n, Kp // tile_k),
            in_specs=[
                pl.BlockSpec((tile_m, tile_k), lambda i, j, k: (i, k)),
                w_spec,
                pl.BlockSpec((1, tile_n), lambda i, j, k: (0, j)),
            ],
            out_specs=pl.BlockSpec((tile_m, tile_n), lambda i, j, k: (i, j)),
            scratch_shapes=[pltpu.VMEM((tile_m, tile_n), jnp.float32)],
        ),
        compiler_params=_compiler_params(
            ("parallel", "parallel", "arbitrary"), block_bytes),
    )(xp, wp, bp)
    if (Mp, Np) != (M, N):
        out = out[:M, :N]
    return out


# ----------------------------------------------------------------------------
# Flash-style causal attention (online softmax, KV axis 'arbitrary')
# ----------------------------------------------------------------------------

def flash_attn_kernel(q_ref, k_ref, v_ref, o_ref, m_ref, l_ref, acc_ref, *, scale):
    qi = pl.program_id(1)
    ki = pl.program_id(2)
    tq = q_ref.shape[0]
    tk = k_ref.shape[0]

    @pl.when(ki == 0)
    def _():
        m_ref[...] = jnp.full_like(m_ref, -jnp.inf)
        l_ref[...] = jnp.zeros_like(l_ref)
        acc_ref[...] = jnp.zeros_like(acc_ref)

    # Skip KV tiles that are entirely above the causal diagonal.
    @pl.when(ki * tk <= qi * tq + (tq - 1))
    def _():
        # Scale q (tq*hd multiplies) instead of the (tq, tk) score matrix.
        q = q_ref[...] * jnp.asarray(scale, dtype=q_ref.dtype)
        s = jax.lax.dot_general(q, k_ref[...], (((1,), (1,)), ((), ())),
                                preferred_element_type=jnp.float32)   # (tq, tk)
        row = qi * tq + jax.lax.broadcasted_iota(jnp.int32, (tq, tk), 0)
        col = ki * tk + jax.lax.broadcasted_iota(jnp.int32, (tq, tk), 1)
        s = jnp.where(col <= row, s, -1e30)

        m_prev = m_ref[...]
        m_new = jnp.maximum(m_prev, jnp.max(s, axis=-1, keepdims=True))
        alpha = jnp.exp(m_prev - m_new)
        p = jnp.exp(s - m_new)
        l_ref[...] = alpha * l_ref[...] + jnp.sum(p, axis=-1, keepdims=True)
        acc_ref[...] = alpha * acc_ref[...] + jnp.dot(
            p.astype(v_ref.dtype), v_ref[...], preferred_element_type=jnp.float32)
        m_ref[...] = m_new

    @pl.when(ki == pl.num_programs(2) - 1)
    def _():
        o_ref[...] = (acc_ref[...]
                      * pl.reciprocal(l_ref[...], approx=True)).astype(o_ref.dtype)


def flash_attention_pallas(q, k, v, *, tq=None, tk=None):
    """q, k, v: [B*n_head, T, hd] -> [B*n_head, T, hd], causal."""
    BH, T, hd = q.shape
    scale = 1.0 / math.sqrt(hd)
    tq = tq or _pick_tile(T, 256, (128, 8))
    tk = tk or _pick_tile(T, 512, (128, 8))
    assert T % tq == 0 and T % tk == 0

    itq = jnp.dtype(q.dtype).itemsize
    block_bytes = (2 * (tq + 2 * tk) * hd * itq + tq * hd * itq
                   + tq * tk * 4 + tq * (hd + 2) * 4)

    q_spec = pl.BlockSpec((None, tq, hd), lambda b, qi, ki: (b, qi, 0))
    kv_spec = pl.BlockSpec((None, tk, hd), lambda b, qi, ki: (b, ki, 0))
    return pl.pallas_call(
        functools.partial(flash_attn_kernel, scale=scale),
        out_shape=jax.ShapeDtypeStruct((BH, T, hd), q.dtype),
        grid_spec=pltpu.PrefetchScalarGridSpec(
            num_scalar_prefetch=0,
            grid=(BH, T // tq, T // tk),
            in_specs=[q_spec, kv_spec, kv_spec],
            out_specs=q_spec,
            scratch_shapes=[pltpu.VMEM((tq, 1), jnp.float32),
                            pltpu.VMEM((tq, 1), jnp.float32),
                            pltpu.VMEM((tq, hd), jnp.float32)],
        ),
        compiler_params=_compiler_params(
            ("parallel", "parallel", "arbitrary"), block_bytes),
    )(q, k, v)


# ----------------------------------------------------------------------------
# Head-merging c_proj: y[B*nh, T, hd] x W[nh, hd, C] -> [B*T, C]
# (the (B, nh, T, hd) -> (B, T, C) merge rides on the reduction axis, so the
#  post-attention transpose never hits HBM)
# ----------------------------------------------------------------------------

def attn_proj_kernel(y_ref, w_ref, b_ref, o_ref, acc_ref):
    h = pl.program_id(3)

    @pl.when(h == 0)
    def _():
        acc_ref[...] = jnp.zeros_like(acc_ref)

    acc_ref[...] += jnp.dot(y_ref[...], w_ref[...],
                            preferred_element_type=jnp.float32)

    @pl.when(h == pl.num_programs(3) - 1)
    def _():
        o_ref[...] = (acc_ref[...]
                      + b_ref[...].astype(jnp.float32)).astype(o_ref.dtype)


def attn_proj_pallas(y, w, b, *, B, T, n_head, tile_m=None, tile_n=None):
    BH, T2, hd = y.shape
    assert BH == B * n_head and T2 == T
    C = w.shape[2]
    tile_m = tile_m or _pick_tile(T, _LIN_ROW_TARGET, (8,))
    tile_n = tile_n or _pick_tile(C, _LANE_TARGET, (256, 128))
    assert T % tile_m == 0 and C % tile_n == 0
    n_row_blocks = T // tile_m

    ity = jnp.dtype(y.dtype).itemsize
    itw = jnp.dtype(w.dtype).itemsize
    block_bytes = (tile_m * hd * ity + hd * tile_n * itw + tile_n * itw
                   + tile_m * tile_n * ity + tile_m * tile_n * 4)

    return pl.pallas_call(
        attn_proj_kernel,
        out_shape=jax.ShapeDtypeStruct((B * T, C), y.dtype),
        grid_spec=pltpu.PrefetchScalarGridSpec(
            num_scalar_prefetch=0,
            grid=(B, n_row_blocks, C // tile_n, n_head),
            in_specs=[
                pl.BlockSpec((None, tile_m, hd),
                             lambda bb, i, j, h: (bb * n_head + h, i, 0)),
                pl.BlockSpec((None, hd, tile_n), lambda bb, i, j, h: (h, 0, j)),
                pl.BlockSpec((1, tile_n), lambda bb, i, j, h: (0, j)),
            ],
            out_specs=pl.BlockSpec(
                (tile_m, tile_n),
                lambda bb, i, j, h: (bb * n_row_blocks + i, j)),
            scratch_shapes=[pltpu.VMEM((tile_m, tile_n), jnp.float32)],
        ),
        compiler_params=_compiler_params(
            ("parallel", "parallel", "parallel", "arbitrary"), block_bytes),
    )(y, w, b.reshape(1, C))


# ----------------------------------------------------------------------------
# Fused MLP kernel: y = gelu(x @ w1 + b1) @ w2 + b2, hidden dim K-tiled
# ----------------------------------------------------------------------------

def mlp_kernel(x_ref, w1_ref, b1_ref, w2_ref, b2_ref, o_ref, acc_ref):
    k = pl.program_id(1)

    @pl.when(k == 0)
    def _():
        acc_ref[...] = jnp.zeros_like(acc_ref)

    h = jnp.dot(x_ref[...], w1_ref[...], preferred_element_type=jnp.float32)
    h = _gelu_tanh(h + b1_ref[...].astype(jnp.float32))          # tanh -> EUP slot
    acc_ref[...] += jnp.dot(h.astype(w2_ref.dtype), w2_ref[...],
                            preferred_element_type=jnp.float32)

    @pl.when(k == pl.num_programs(1) - 1)
    def _():
        o_ref[...] = (acc_ref[...]
                      + b2_ref[...].astype(jnp.float32)).astype(o_ref.dtype)


def mlp_pallas(x2d, w1, b1, w2, b2, *, tile_m=None, tile_h=None):
    M, C = x2d.shape
    H = w1.shape[1]
    tile_m = tile_m or _pick_tile(M, _MLP_ROW_TARGET, (8,))
    tile_h = tile_h or _pick_tile(H, _LANE_TARGET, (256, 128))
    assert M % tile_m == 0 and H % tile_h == 0

    itx = jnp.dtype(x2d.dtype).itemsize
    itw = jnp.dtype(w1.dtype).itemsize
    block_bytes = (tile_m * C * itx + C * tile_h * itw + tile_h * itw
                   + tile_h * C * itw + C * itw + tile_m * C * itx
                   + tile_m * C * 4 + tile_m * tile_h * 4)

    return pl.pallas_call(
        mlp_kernel,
        out_shape=jax.ShapeDtypeStruct((M, C), x2d.dtype),
        grid_spec=pltpu.PrefetchScalarGridSpec(
            num_scalar_prefetch=0,
            grid=(M // tile_m, H // tile_h),
            in_specs=[
                pl.BlockSpec((tile_m, C), lambda i, k: (i, 0)),
                pl.BlockSpec((C, tile_h), lambda i, k: (0, k)),
                pl.BlockSpec((1, tile_h), lambda i, k: (0, k)),
                pl.BlockSpec((tile_h, C), lambda i, k: (k, 0)),
                pl.BlockSpec((1, C), lambda i, k: (0, 0)),
            ],
            out_specs=pl.BlockSpec((tile_m, C), lambda i, k: (i, 0)),
            scratch_shapes=[pltpu.VMEM((tile_m, C), jnp.float32)],
        ),
        compiler_params=_compiler_params(("parallel", "arbitrary"), block_bytes),
    )(x2d, w1, b1.reshape(1, H), w2, b2.reshape(1, C))


# ----------------------------------------------------------------------------
# GPT forward (Pallas)
# ----------------------------------------------------------------------------

def attention_pallas(h2d, blk, *, B, T, n_head):
    M, C = h2d.shape
    hd = C // n_head
    qkv = linear_pallas(h2d, blk["w_qkv"], blk["b_qkv"])           # (M, 3C)
    # TODO(synk): the q/k/v head split below is still a full-activation XLA
    # relayout; folding it into the c_attn out_spec would need hd-wide
    # (non lane-dense) output blocks that hurt MXU utilization, so it stays.
    qkv = qkv.reshape(B, T, 3, n_head, hd).transpose(2, 0, 3, 1, 4)
    q = qkv[0].reshape(B * n_head, T, hd)
    k = qkv[1].reshape(B * n_head, T, hd)
    v = qkv[2].reshape(B * n_head, T, hd)
    y = flash_attention_pallas(q, k, v)                            # (B*nh, T, hd)
    # Head merge fused into c_proj's reduction axis (no transpose back).
    return attn_proj_pallas(y, blk["w_proj"], blk["b_proj"],
                            B=B, T=T, n_head=n_head)               # (M, C)


def gpt_pallas(pparams, idx, *, n_head):
    B, T = idx.shape
    wte, wpe = pparams["wte"], pparams["wpe"]
    C = wte.shape[1]
    M = B * T
    # TODO(synk): token/position embedding gather stays in plain JAX (jnp.take).
    tok = jnp.take(wte, idx.reshape(-1), axis=0)                            # (M, C)
    pos = jnp.broadcast_to(wpe[:T][None, :, :], (B, T, C)).reshape(M, C)    # (M, C)

    blocks = pparams["blocks"]
    n_layer = len(blocks)
    # Fused residual-add + LayerNorm chain: each call produces the new residual
    # stream `s` and the LN input `h` for the next branch in a single pass.
    s, h = add_layernorm_pallas(tok, pos, blocks[0]["ln1_g"], blocks[0]["ln1_b"])
    for layer, blk in enumerate(blocks):
        attn_out = attention_pallas(h, blk, B=B, T=T, n_head=n_head)
        s, h = add_layernorm_pallas(s, attn_out, blk["ln2_g"], blk["ln2_b"])
        mlp_out = mlp_pallas(h, blk["w_fc"], blk["b_fc"],
                             blk["w_proj2"], blk["b_proj2"])
        if layer + 1 < n_layer:
            g, bta = blocks[layer + 1]["ln1_g"], blocks[layer + 1]["ln1_b"]
        else:
            g, bta = pparams["lnf_g"], pparams["lnf_b"]
        s, h = add_layernorm_pallas(s, mlp_out, g, bta)

    # Tied lm_head consumes wte (V, C) directly via the transpose_rhs path.
    # TODO(synk): cross-entropy loss branch (targets != None) not implemented.
    logits2d = linear_pallas(h, wte, None, transpose_rhs=True,
                             out_dtype=jnp.float32)
    return logits2d.reshape(B, T, wte.shape[0])


# ----------------------------------------------------------------------------
# Pure-JAX reference (f32, PyTorch-layout weights)
# ----------------------------------------------------------------------------

def _layernorm_ref(x, g, b, eps=1e-5):
    mu = jnp.mean(x, axis=-1, keepdims=True)
    var = jnp.mean(jnp.square(x - mu), axis=-1, keepdims=True)
    return (x - mu) * jax.lax.rsqrt(var + eps) * g + b


def _attn_ref(x, p, n_head):
    B, T, C = x.shape
    hd = C // n_head
    qkv = x @ p["w_qkv"] + p["b_qkv"]
    q, k, v = jnp.split(qkv, 3, axis=-1)
    q = q.reshape(B, T, n_head, hd).transpose(0, 2, 1, 3)
    k = k.reshape(B, T, n_head, hd).transpose(0, 2, 1, 3)
    v = v.reshape(B, T, n_head, hd).transpose(0, 2, 1, 3)
    att = jnp.einsum("bhqd,bhkd->bhqk", q, k) * (1.0 / math.sqrt(hd))
    mask = jnp.tril(jnp.ones((T, T), dtype=bool))
    att = jnp.where(mask, att, -1e30)
    att = jax.nn.softmax(att, axis=-1)
    y = jnp.einsum("bhqk,bhkd->bhqd", att, v)
    y = y.transpose(0, 2, 1, 3).reshape(B, T, C)
    return y @ p["w_proj"] + p["b_proj"]


def _mlp_ref(x, p):
    h = _gelu_tanh(x @ p["w_fc"] + p["b_fc"])
    return h @ p["w_proj2"] + p["b_proj2"]


def gpt_reference(params, idx, n_head):
    B, T = idx.shape
    x = params["wte"][idx] + params["wpe"][:T][None, :, :]
    for blk in params["blocks"]:
        x = x + _attn_ref(_layernorm_ref(x, blk["ln1_g"], blk["ln1_b"]), blk, n_head)
        x = x + _mlp_ref(_layernorm_ref(x, blk["ln2_g"], blk["ln2_b"]), blk)
    x = _layernorm_ref(x, params["lnf_g"], params["lnf_b"])
    return x @ params["wte"].T


# ----------------------------------------------------------------------------
# Deterministic init (reference layout, f32) + conversion to Pallas layout/bf16
# ----------------------------------------------------------------------------

def init_params(key, cfg):
    V, S, L, C = cfg["vocab_size"], cfg["block_size"], cfg["n_layer"], cfg["n_embd"]
    H = 4 * C
    proj_std = 0.02 * (2 * L) ** -0.5   # NANOGPT residual-proj scaling
    keys = jax.random.split(key, 2 + L)
    f32 = jnp.float32
    params = {
        "wte": 0.02 * jax.random.normal(keys[0], (V, C), f32),
        "wpe": 0.02 * jax.random.normal(keys[1], (S, C), f32),
        "lnf_g": jnp.ones((C,), f32),
        "lnf_b": jnp.zeros((C,), f32),
        "blocks": [],
    }
    for layer in range(L):
        ks = jax.random.split(keys[2 + layer], 8)
        params["blocks"].append({
            "ln1_g": jnp.ones((C,), f32),
            "ln1_b": 0.01 * jax.random.normal(ks[6], (C,), f32),
            "w_qkv": 0.02 * jax.random.normal(ks[0], (C, 3 * C), f32),
            "b_qkv": 0.02 * jax.random.normal(ks[1], (3 * C,), f32),
            "w_proj": proj_std * jax.random.normal(ks[2], (C, C), f32),
            "b_proj": 0.02 * jax.random.normal(ks[7], (C,), f32),
            "ln2_g": jnp.ones((C,), f32),
            "ln2_b": jnp.zeros((C,), f32),
            "w_fc": 0.02 * jax.random.normal(ks[3], (C, H), f32),
            "b_fc": 0.02 * jax.random.normal(ks[4], (H,), f32),
            "w_proj2": proj_std * jax.random.normal(ks[5], (H, C), f32),
            "b_proj2": jnp.zeros((C,), f32),
        })
    return params


def to_pallas_params(params, n_head, dtype=jnp.bfloat16):
    """bf16 copy of the params; c_proj weight re-laid-out as (n_head, hd, C)
    for the head-merging projection kernel."""
    def cast(a):
        return a.astype(dtype)
    out = {
        "wte": cast(params["wte"]),
        "wpe": cast(params["wpe"]),
        "lnf_g": cast(params["lnf_g"]),
        "lnf_b": cast(params["lnf_b"]),
        "blocks": [],
    }
    for blk in params["blocks"]:
        C = blk["w_proj"].shape[0]
        hd = C // n_head
        nb = {k: cast(v) for k, v in blk.items()}
        nb["w_proj"] = cast(blk["w_proj"]).reshape(n_head, hd, C)
        out["blocks"].append(nb)
    return out


if __name__ == "__main__":
    cfg = dict(vocab_size=64, block_size=16, n_layer=2, n_head=4, n_embd=32)
    B, T = 2, 8

    key = jax.random.PRNGKey(0)
    kp, ki = jax.random.split(key)
    params = init_params(kp, cfg)
    idx = jax.random.randint(ki, (B, T), 0, cfg["vocab_size"], dtype=jnp.int32)

    pparams = to_pallas_params(params, cfg["n_head"])
    forward = jax.jit(functools.partial(gpt_pallas, n_head=cfg["n_head"]))
    logits = jax.block_until_ready(forward(pparams, idx))

    # Reference in f32 using the same bf16-rounded weights as the Pallas path.
    ref_params = jax.tree_util.tree_map(
        lambda a: a.astype(jnp.bfloat16).astype(jnp.float32), params)
    ref = gpt_reference(ref_params, idx, cfg["n_head"])

    assert logits.shape == (B, T, cfg["vocab_size"])
    err = float(jnp.max(jnp.abs(logits.astype(jnp.float32) - ref)))
    assert err < 7.5e-2, f"mismatch, max abs err={err}"

    print("KERNEL_OK")
</pallas_src>

<mosaic_0001>
module attributes {stable_mosaic.version = 11 : i64} {
  func.func @linear_kernel(%arg0: i32, %arg1: i32, %arg2: i32, %arg3: memref<16x32xbf16, #tpu.memory_space<vmem>>, %arg4: memref<32x96xbf16, #tpu.memory_space<vmem>>, %arg5: memref<1x96xbf16, #tpu.memory_space<vmem>>, %arg6: memref<16x96xbf16, #tpu.memory_space<vmem>>, %arg7: memref<16x96xf32, #tpu.memory_space<vmem>>) attributes {dimension_semantics = [#tpu.dimension_semantics<parallel>, #tpu.dimension_semantics<parallel>, #tpu.dimension_semantics<arbitrary>], iteration_bounds = array<i64: 1, 1, 1>, scalar_prefetch = 0 : i64, scratch_operands = 1 : i64, tpu.core_type = #tpu.core_type<tc>, window_params = [{transform_indices = @transform_0, window_bounds = array<i64: 16, 32>}, {transform_indices = @transform_1, window_bounds = array<i64: 32, 96>}, {transform_indices = @transform_2, window_bounds = array<i64: 1, 96>}, {transform_indices = @transform_3, window_bounds = array<i64: 16, 96>}]} {
    %c0_i32 = arith.constant 0 : i32
    %0 = arith.cmpi eq, %arg2, %c0_i32 : i32
    %1 = arith.extui %0 : i1 to i32
    %c0_i32_0 = arith.constant 0 : i32
    %2 = arith.cmpi ne, %1, %c0_i32_0 : i32
    scf.if %2 {
      %cst_10 = arith.constant 0.000000e+00 : f32
      %12 = vector.broadcast %cst_10 : f32 to vector<16x96xf32>
      %c0_11 = arith.constant 0 : index
      %c0_12 = arith.constant 0 : index
      %13 = vector.load %arg7[%c0_11, %c0_12] : memref<16x96xf32, #tpu.memory_space<vmem>>, vector<16x96xf32>
      tpu.vector_store %arg7[%c0_11, %c0_12], %12 {strides = array<i32>} : memref<16x96xf32, #tpu.memory_space<vmem>>, vector<16x96xf32>,
    } else {
    }
    %c0 = arith.constant 0 : index
    %c0_1 = arith.constant 0 : index
    %3 = vector.load %arg7[%c0, %c0_1] : memref<16x96xf32, #tpu.memory_space<vmem>>, vector<16x96xf32>
    %c0_2 = arith.constant 0 : index
    %c0_3 = arith.constant 0 : index
    %4 = vector.load %arg3[%c0_2, %c0_3] : memref<16x32xbf16, #tpu.memory_space<vmem>>, vector<16x32xbf16>
    %c0_4 = arith.constant 0 : index
    %c0_5 = arith.constant 0 : index
    %5 = vector.load %arg4[%c0_4, %c0_5] : memref<32x96xbf16, #tpu.memory_space<vmem>>, vector<32x96xbf16>
    %cst = arith.constant dense<0.000000e+00> : vector<16x96xf32>
    %6 = tpu.matmul %4, %5, %cst {dimension_numbers = #tpu.dot_dimension_numbers<[1], [0], [0], [1], [0, 0, 1, 1], [], []>} : vector<16x32xbf16>, vector<32x96xbf16>, vector<16x96xf32> -> vector<16x96xf32>
    %7 = arith.addf %3, %6 : vector<16x96xf32>
    %c0_6 = arith.constant 0 : index
    %c0_7 = arith.constant 0 : index
    %8 = vector.load %arg7[%c0_6, %c0_7] : memref<16x96xf32, #tpu.memory_space<vmem>>, vector<16x96xf32>
    tpu.vector_store %arg7[%c0_6, %c0_7], %7 {strides = array<i32>} : memref<16x96xf32, #tpu.memory_space<vmem>>, vector<16x96xf32>,
    %c0_i32_8 = arith.constant 0 : i32
    %9 = arith.cmpi eq, %arg2, %c0_i32_8 : i32
    %10 = arith.extui %9 : i1 to i32
    %c0_i32_9 = arith.constant 0 : i32
    %11 = arith.cmpi ne, %10, %c0_i32_9 : i32
    scf.if %11 {
      %c0_10 = arith.constant 0 : index
      %c0_11 = arith.constant 0 : index
      %12 = vector.load %arg7[%c0_10, %c0_11] : memref<16x96xf32, #tpu.memory_space<vmem>>, vector<16x96xf32>
      %c0_12 = arith.constant 0 : index
      %c0_13 = arith.constant 0 : index
      %13 = vector.load %arg5[%c0_12, %c0_13] : memref<1x96xbf16, #tpu.memory_space<vmem>>, vector<1x96xbf16>
      %14 = arith.extf %13 : vector<1x96xbf16> to vector<1x96xf32>
      %15 = vector.broadcast %14 : vector<1x96xf32> to vector<16x96xf32>
      %16 = arith.addf %12, %15 : vector<16x96xf32>
      %17 = arith.truncf %16 : vector<16x96xf32> to vector<16x96xbf16>
      %c0_14 = arith.constant 0 : index
      %c0_15 = arith.constant 0 : index
      %18 = vector.load %arg6[%c0_14, %c0_15] : memref<16x96xbf16, #tpu.memory_space<vmem>>, vector<16x96xbf16>
      tpu.vector_store %arg6[%c0_14, %c0_15], %17 {strides = array<i32>} : memref<16x96xbf16, #tpu.memory_space<vmem>>, vector<16x96xbf16>,
    } else {
    }
    return
  }
  func.func @transform_0(%arg0: i32, %arg1: i32, %arg2: i32) -> (i32, i32) {
    %c0_i32 = arith.constant 0 : i32
    return %arg0, %arg2 : i32, i32
  }
  func.func @transform_1(%arg0: i32, %arg1: i32, %arg2: i32) -> (i32, i32) {
    %c0_i32 = arith.constant 0 : i32
    return %arg2, %arg1 : i32, i32
  }
  func.func @transform_2(%arg0: i32, %arg1: i32, %arg2: i32) -> (i32, i32) {
    %c0_i32 = arith.constant 0 : i32
    %c0_i32_0 = arith.constant 0 : i32
    return %c0_i32, %arg1 : i32, i32
  }
  func.func @transform_3(%arg0: i32, %arg1: i32, %arg2: i32) -> (i32, i32) {
    %c0_i32 = arith.constant 0 : i32
    return %arg0, %arg1 : i32, i32
  }
}

module attributes {stable_mosaic.version = 11 : i64} {
  func.func @add_layernorm_kernel(%arg0: i32, %arg1: memref<16x32xbf16, #tpu.memory_space<vmem>>, %arg2: memref<16x32xbf16, #tpu.memory_space<vmem>>, %arg3: memref<1x32xbf16, #tpu.memory_space<vmem>>, %arg4: memref<1x32xbf16, #tpu.memory_space<vmem>>, %arg5: memref<16x32xbf16, #tpu.memory_space<vmem>>, %arg6: memref<16x32xbf16, #tpu.memory_space<vmem>>) attributes {dimension_semantics = [#tpu.dimension_semantics<parallel>], iteration_bounds = array<i64: 1>, scalar_prefetch = 0 : i64, scratch_operands = 0 : i64, tpu.core_type = #tpu.core_type<tc>, window_params = [{transform_indices = @transform_0, window_bounds = array<i64: 16, 32>}, {transform_indices = @transform_1, window_bounds = array<i64: 16, 32>}, {pipeline_mode = #tpu.pipeline_mode<synchronous>, transform_indices = @transform_2, window_bounds = array<i64: 1, 32>}, {pipeline_mode = #tpu.pipeline_mode<synchronous>, transform_indices = @transform_3, window_bounds = array<i64: 1, 32>}, {transform_indices = @transform_4, window_bounds = array<i64: 16, 32>}, {transform_indices = @transform_5, window_bounds = array<i64: 16, 32>}]} {
    %c0 = arith.constant 0 : index
    %c0_0 = arith.constant 0 : index
    %0 = vector.load %arg1[%c0, %c0_0] : memref<16x32xbf16, #tpu.memory_space<vmem>>, vector<16x32xbf16>
    %1 = arith.extf %0 : vector<16x32xbf16> to vector<16x32xf32>
    %c0_1 = arith.constant 0 : index
    %c0_2 = arith.constant 0 : index
    %2 = vector.load %arg2[%c0_1, %c0_2] : memref<16x32xbf16, #tpu.memory_space<vmem>>, vector<16x32xbf16>
    %3 = arith.extf %2 : vector<16x32xbf16> to vector<16x32xf32>
    %4 = arith.addf %1, %3 : vector<16x32xf32>
    %5 = arith.truncf %4 : vector<16x32xf32> to vector<16x32xbf16>
    %c0_3 = arith.constant 0 : index
    %c0_4 = arith.constant 0 : index
    %6 = vector.load %arg5[%c0_3, %c0_4] : memref<16x32xbf16, #tpu.memory_space<vmem>>, vector<16x32xbf16>
    tpu.vector_store %arg5[%c0_3, %c0_4], %5 {strides = array<i32>} : memref<16x32xbf16, #tpu.memory_space<vmem>>, vector<16x32xbf16>,
    %cst = arith.constant dense<0.000000e+00> : vector<16xf32>
    %7 = vector.multi_reduction <add>, %4, %cst [1] : vector<16x32xf32> to vector<16xf32>
    %8 = vector.shape_cast %7 : vector<16xf32> to vector<16x1xf32>
    %cst_5 = arith.constant 3.200000e+01 : f32
    %9 = vector.broadcast %cst_5 : f32 to vector<16x1xf32>
    %10 = arith.divf %8, %9 : vector<16x1xf32>
    %11 = vector.broadcast %10 : vector<16x1xf32> to vector<16x32xf32>
    %12 = arith.subf %4, %11 : vector<16x32xf32>
    %13 = arith.mulf %12, %12 : vector<16x32xf32>
    %cst_6 = arith.constant dense<0.000000e+00> : vector<16xf32>
    %14 = vector.multi_reduction <add>, %13, %cst_6 [1] : vector<16x32xf32> to vector<16xf32>
    %15 = vector.shape_cast %14 : vector<16xf32> to vector<16x1xf32>
    %cst_7 = arith.constant 3.200000e+01 : f32
    %16 = vector.broadcast %cst_7 : f32 to vector<16x1xf32>
    %17 = arith.divf %15, %16 : vector<16x1xf32>
    %18 = vector.broadcast %10 : vector<16x1xf32> to vector<16x32xf32>
    %19 = arith.subf %4, %18 : vector<16x32xf32>
    %cst_8 = arith.constant 9.99999974E-6 : f32
    %20 = vector.broadcast %cst_8 : f32 to vector<16x1xf32>
    %21 = arith.addf %17, %20 : vector<16x1xf32>
    %22 = math.rsqrt %21 : vector<16x1xf32>
    %23 = vector.broadcast %22 : vector<16x1xf32> to vector<16x32xf32>
    %24 = arith.mulf %19, %23 : vector<16x32xf32>
    %c0_9 = arith.constant 0 : index
    %c0_10 = arith.constant 0 : index
    %25 = vector.load %arg3[%c0_9, %c0_10] : memref<1x32xbf16, #tpu.memory_space<vmem>>, vector<1x32xbf16>
    %26 = arith.extf %25 : vector<1x32xbf16> to vector<1x32xf32>
    %27 = vector.broadcast %26 : vector<1x32xf32> to vector<16x32xf32>
    %28 = arith.mulf %24, %27 : vector<16x32xf32>
    %c0_11 = arith.constant 0 : index
    %c0_12 = arith.constant 0 : index
    %29 = vector.load %arg4[%c0_11, %c0_12] : memref<1x32xbf16, #tpu.memory_space<vmem>>, vector<1x32xbf16>
    %30 = arith.extf %29 : vector<1x32xbf16> to vector<1x32xf32>
    %31 = vector.broadcast %30 : vector<1x32xf32> to vector<16x32xf32>
    %32 = arith.addf %28, %31 : vector<16x32xf32>
    %33 = arith.truncf %32 : vector<16x32xf32> to vector<16x32xbf16>
    %c0_13 = arith.constant 0 : index
    %c0_14 = arith.constant 0 : index
    %34 = vector.load %arg6[%c0_13, %c0_14] : memref<16x32xbf16, #tpu.memory_space<vmem>>, vector<16x32xbf16>
    tpu.vector_store %arg6[%c0_13, %c0_14], %33 {strides = array<i32>} : memref<16x32xbf16, #tpu.memory_space<vmem>>, vector<16x32xbf16>,
    return
  }
  func.func @transform_0(%arg0: i32) -> (i32, i32) {
    %c0_i32 = arith.constant 0 : i32
    %c0_i32_0 = arith.constant 0 : i32
    return %arg0, %c0_i32 : i32, i32
  }
  func.func @transform_1(%arg0: i32) -> (i32, i32) {
    %c0_i32 = arith.constant 0 : i32
    %c0_i32_0 = arith.constant 0 : i32
    return %arg0, %c0_i32 : i32, i32
  }
  func.func @transform_2(%arg0: i32) -> (i32, i32) {
    %c0_i32 = arith.constant 0 : i32
    %c0_i32_0 = arith.constant 0 : i32
    %c0_i32_1 = arith.constant 0 : i32
    return %c0_i32, %c0_i32_0 : i32, i32
  }
  func.func @transform_3(%arg0: i32) -> (i32, i32) {
    %c0_i32 = arith.constant 0 : i32
    %c0_i32_0 = arith.constant 0 : i32
    %c0_i32_1 = arith.constant 0 : i32
    return %c0_i32, %c0_i32_0 : i32, i32
  }
  func.func @transform_4(%arg0: i32) -> (i32, i32) {
    %c0_i32 = arith.constant 0 : i32
    %c0_i32_0 = arith.constant 0 : i32
    return %arg0, %c0_i32 : i32, i32
  }
  func.func @transform_5(%arg0: i32) -> (i32, i32) {
    %c0_i32 = arith.constant 0 : i32
    %c0_i32_0 = arith.constant 0 : i32
    return %arg0, %c0_i32 : i32, i32
  }
}

module attributes {stable_mosaic.version = 11 : i64} {
  func.func @flash_attn_kernel(%arg0: i32, %arg1: i32, %arg2: i32, %arg3: memref<1x8x8xbf16, #tpu.memory_space<vmem>>, %arg4: memref<1x8x8xbf16, #tpu.memory_space<vmem>>, %arg5: memref<1x8x8xbf16, #tpu.memory_space<vmem>>, %arg6: memref<1x8x8xbf16, #tpu.memory_space<vmem>>, %arg7: memref<8x1xf32, #tpu.memory_space<vmem>>, %arg8: memref<8x1xf32, #tpu.memory_space<vmem>>, %arg9: memref<8x8xf32, #tpu.memory_space<vmem>>) attributes {dimension_semantics = [#tpu.dimension_semantics<parallel>, #tpu.dimension_semantics<parallel>, #tpu.dimension_semantics<arbitrary>], iteration_bounds = array<i64: 8, 1, 1>, scalar_prefetch = 0 : i64, scratch_operands = 3 : i64, tpu.core_type = #tpu.core_type<tc>, window_params = [{transform_indices = @transform_0, window_bounds = array<i64: 1, 8, 8>}, {transform_indices = @transform_1, window_bounds = array<i64: 1, 8, 8>}, {transform_indices = @transform_2, window_bounds = array<i64: 1, 8, 8>}, {transform_indices = @transform_3, window_bounds = array<i64: 1, 8, 8>}]} {
    %c0_i32 = arith.constant 0 : i32
    %0 = arith.cmpi eq, %arg2, %c0_i32 : i32
    %1 = arith.extui %0 : i1 to i32
    %c0_i32_0 = arith.constant 0 : i32
    %2 = arith.cmpi ne, %1, %c0_i32_0 : i32
    scf.if %2 {
      %cst = arith.constant 0xFF800000 : f32
      %12 = vector.broadcast %cst : f32 to vector<8x1xf32>
      %c0 = arith.constant 0 : index
      %c0_5 = arith.constant 0 : index
      %13 = vector.load %arg7[%c0, %c0_5] : memref<8x1xf32, #tpu.memory_space<vmem>>, vector<8x1xf32>
      tpu.vector_store %arg7[%c0, %c0_5], %12 {strides = array<i32>} : memref<8x1xf32, #tpu.memory_space<vmem>>, vector<8x1xf32>,
      %cst_6 = arith.constant 0.000000e+00 : f32
      %14 = vector.broadcast %cst_6 : f32 to vector<8x1xf32>
      %c0_7 = arith.constant 0 : index
      %c0_8 = arith.constant 0 : index
      %15 = vector.load %arg8[%c0_7, %c0_8] : memref<8x1xf32, #tpu.memory_space<vmem>>, vector<8x1xf32>
      tpu.vector_store %arg8[%c0_7, %c0_8], %14 {strides = array<i32>} : memref<8x1xf32, #tpu.memory_space<vmem>>, vector<8x1xf32>,
      %cst_9 = arith.constant 0.000000e+00 : f32
      %16 = vector.broadcast %cst_9 : f32 to vector<8x8xf32>
      %c0_10 = arith.constant 0 : index
      %c0_11 = arith.constant 0 : index
      %17 = vector.load %arg9[%c0_10, %c0_11] : memref<8x8xf32, #tpu.memory_space<vmem>>, vector<8x8xf32>
      tpu.vector_store %arg9[%c0_10, %c0_11], %16 {strides = array<i32>} : memref<8x8xf32, #tpu.memory_space<vmem>>, vector<8x8xf32>,
    } else {
    }
    %c8_i32 = arith.constant 8 : i32
    %3 = arith.muli %arg2, %c8_i32 : i32
    %c8_i32_1 = arith.constant 8 : i32
    %4 = arith.muli %arg1, %c8_i32_1 : i32
    %c7_i32 = arith.constant 7 : i32
    %5 = arith.addi %4, %c7_i32 : i32
    %6 = arith.cmpi sle, %3, %5 : i32
    %7 = arith.extui %6 : i1 to i32
    %c0_i32_2 = arith.constant 0 : i32
    %8 = arith.cmpi ne, %7, %c0_i32_2 : i32
    scf.if %8 {
      %c0 = arith.constant 0 : index
      %c0_5 = arith.constant 0 : index
      %c0_6 = arith.constant 0 : index
      %12 = vector.load %arg3[%c0, %c0_5, %c0_6] : memref<1x8x8xbf16, #tpu.memory_space<vmem>>, vector<1x8x8xbf16>
      %13 = vector.shape_cast %12 : vector<1x8x8xbf16> to vector<8x8xbf16>
      %cst = arith.constant 3.535160e-01 : bf16
      %14 = vector.broadcast %cst : bf16 to vector<8x8xbf16>
      %15 = arith.mulf %13, %14 : vector<8x8xbf16>
      %c0_7 = arith.constant 0 : index
      %c0_8 = arith.constant 0 : index
      %c0_9 = arith.constant 0 : index
      %16 = vector.load %arg4[%c0_7, %c0_8, %c0_9] : memref<1x8x8xbf16, #tpu.memory_space<vmem>>, vector<1x8x8xbf16>
      %17 = vector.shape_cast %16 : vector<1x8x8xbf16> to vector<8x8xbf16>
      %cst_10 = arith.constant dense<0.000000e+00> : vector<8x8xf32>
      %18 = tpu.matmul %15, %17, %cst_10 {dimension_numbers = #tpu.dot_dimension_numbers<[1], [1], [0], [0], [0, 0, 1, 0], [], []>} : vector<8x8xbf16>, vector<8x8xbf16>, vector<8x8xf32> -> vector<8x8xf32>
      %c8_i32_11 = arith.constant 8 : i32
      %19 = arith.muli %arg1, %c8_i32_11 : i32
      %20 = tpu.iota {dimensions = array<i32: 0>} : vector<8x8xi32>
      %21 = vector.broadcast %19 : i32 to vector<8x8xi32>
      %22 = arith.addi %21, %20 : vector<8x8xi32>
      %c8_i32_12 = arith.constant 8 : i32
      %23 = arith.muli %arg2, %c8_i32_12 : i32
      %24 = tpu.iota {dimensions = array<i32: 1>} : vector<8x8xi32>
      %25 = vector.broadcast %23 : i32 to vector<8x8xi32>
      %26 = arith.addi %25, %24 : vector<8x8xi32>
      %27 = arith.cmpi sle, %26, %22 : vector<8x8xi32>
      %cst_13 = arith.constant -1.000000e+30 : f32
      %28 = vector.broadcast %cst_13 : f32 to vector<8x8xf32>
      %29 = arith.select %27, %18, %28 : vector<8x8xi1>, vector<8x8xf32>
      %c0_14 = arith.constant 0 : index
      %c0_15 = arith.constant 0 : index
      %30 = vector.load %arg7[%c0_14, %c0_15] : memref<8x1xf32, #tpu.memory_space<vmem>>, vector<8x1xf32>
      %cst_16 = arith.constant dense<0xFF800000> : vector<8xf32>
      %31 = vector.multi_reduction <maximumf>, %29, %cst_16 [1] : vector<8x8xf32> to vector<8xf32>
      %32 = vector.shape_cast %31 : vector<8xf32> to vector<8x1xf32>
      %33 = arith.maximumf %30, %32 : vector<8x1xf32>
      %34 = arith.subf %30, %33 : vector<8x1xf32>
      %35 = math.exp %34 : vector<8x1xf32>
      %36 = vector.broadcast %33 : vector<8x1xf32> to vector<8x8xf32>
      %37 = arith.subf %29, %36 : vector<8x8xf32>
      %38 = math.exp %37 : vector<8x8xf32>
      %c0_17 = arith.constant 0 : index
      %c0_18 = arith.constant 0 : index
      %39 = vector.load %arg8[%c0_17, %c0_18] : memref<8x1xf32, #tpu.memory_space<vmem>>, vector<8x1xf32>
      %40 = arith.mulf %35, %39 : vector<8x1xf32>
      %cst_19 = arith.constant dense<0.000000e+00> : vector<8xf32>
      %41 = vector.multi_reduction <add>, %38, %cst_19 [1] : vector<8x8xf32> to vector<8xf32>
      %42 = vector.shape_cast %41 : vector<8xf32> to vector<8x1xf32>
      %43 = arith.addf %40, %42 : vector<8x1xf32>
      %c0_20 = arith.constant 0 : index
      %c0_21 = arith.constant 0 : index
      %44 = vector.load %arg8[%c0_20, %c0_21] : memref<8x1xf32, #tpu.memory_space<vmem>>, vector<8x1xf32>
      tpu.vector_store %arg8[%c0_20, %c0_21], %43 {strides = array<i32>} : memref<8x1xf32, #tpu.memory_space<vmem>>, vector<8x1xf32>,
      %c0_22 = arith.constant 0 : index
      %c0_23 = arith.constant 0 : index
      %45 = vector.load %arg9[%c0_22, %c0_23] : memref<8x8xf32, #tpu.memory_space<vmem>>, vector<8x8xf32>
      %46 = vector.broadcast %35 : vector<8x1xf32> to vector<8x8xf32>
      %47 = arith.mulf %46, %45 : vector<8x8xf32>
      %48 = arith.truncf %38 : vector<8x8xf32> to vector<8x8xbf16>
      %c0_24 = arith.constant 0 : index
      %c0_25 = arith.constant 0 : index
      %c0_26 = arith.constant 0 : index
      %49 = vector.load %arg5[%c0_24, %c0_25, %c0_26] : memref<1x8x8xbf16, #tpu.memory_space<vmem>>, vector<1x8x8xbf16>
      %50 = vector.shape_cast %49 : vector<1x8x8xbf16> to vector<8x8xbf16>
      %cst_27 = arith.constant dense<0.000000e+00> : vector<8x8xf32>
      %51 = tpu.matmul %48, %50, %cst_27 {dimension_numbers = #tpu.dot_dimension_numbers<[1], [0], [0], [1], [0, 0, 1, 1], [], []>} : vector<8x8xbf16>, vector<8x8xbf16>, vector<8x8xf32> -> vector<8x8xf32>
      %52 = arith.addf %47, %51 : vector<8x8xf32>
      %c0_28 = arith.constant 0 : index
      %c0_29 = arith.constant 0 : index
      %53 = vector.load %arg9[%c0_28, %c0_29] : memref<8x8xf32, #tpu.memory_space<vmem>>, vector<8x8xf32>
      tpu.vector_store %arg9[%c0_28, %c0_29], %52 {strides = array<i32>} : memref<8x8xf32, #tpu.memory_space<vmem>>, vector<8x8xf32>,
      %c0_30 = arith.constant 0 : index
      %c0_31 = arith.constant 0 : index
      %54 = vector.load %arg7[%c0_30, %c0_31] : memref<8x1xf32, #tpu.memory_space<vmem>>, vector<8x1xf32>
      tpu.vector_store %arg7[%c0_30, %c0_31], %33 {strides = array<i32>} : memref<8x1xf32, #tpu.memory_space<vmem>>, vector<8x1xf32>,
    } else {
    }
    %c0_i32_3 = arith.constant 0 : i32
    %9 = arith.cmpi eq, %arg2, %c0_i32_3 : i32
    %10 = arith.extui %9 : i1 to i32
    %c0_i32_4 = arith.constant 0 : i32
    %11 = arith.cmpi ne, %10, %c0_i32_4 : i32
    scf.if %11 {
      %c0 = arith.constant 0 : index
      %c0_5 = arith.constant 0 : index
      %12 = vector.load %arg9[%c0, %c0_5] : memref<8x8xf32, #tpu.memory_space<vmem>>, vector<8x8xf32>
      %c0_6 = arith.constant 0 : index
      %c0_7 = arith.constant 0 : index
      %13 = vector.load %arg8[%c0_6, %c0_7] : memref<8x1xf32, #tpu.memory_space<vmem>>, vector<8x1xf32>
      %14 = tpu.reciprocal %13 {approx = true} : vector<8x1xf32> -> vector<8x1xf32>
      %15 = vector.broadcast %14 : vector<8x1xf32> to vector<8x8xf32>
      %16 = arith.mulf %12, %15 : vector<8x8xf32>
      %17 = arith.truncf %16 : vector<8x8xf32> to vector<8x8xbf16>
      %c0_8 = arith.constant 0 : index
      %c0_9 = arith.constant 0 : index
      %c0_10 = arith.constant 0 : index
      %18 = vector.load %arg6[%c0_8, %c0_9, %c0_10] : memref<1x8x8xbf16, #tpu.memory_space<vmem>>, vector<1x8x8xbf16>
      %19 = vector.shape_cast %18 : vector<1x8x8xbf16> to vector<8x8xbf16>
      %20 = vector.shape_cast %17 : vector<8x8xbf16> to vector<1x8x8xbf16>
      tpu.vector_store %arg6[%c0_8, %c0_9, %c0_10], %20 {strides = array<i32>} : memref<1x8x8xbf16, #tpu.memory_space<vmem>>, vector<1x8x8xbf16>,
    } else {
    }
    return
  }
  func.func @transform_0(%arg0: i32, %arg1: i32, %arg2: i32) -> (i32, i32, i32) {
    %c0_i32 = arith.constant 0 : i32
    %c0_i32_0 = arith.constant 0 : i32
    return %arg0, %arg1, %c0_i32 : i32, i32, i32
  }
  func.func @transform_1(%arg0: i32, %arg1: i32, %arg2: i32) -> (i32, i32, i32) {
    %c0_i32 = arith.constant 0 : i32
    %c0_i32_0 = arith.constant 0 : i32
    return %arg0, %arg2, %c0_i32 : i32, i32, i32
  }
  func.func @transform_2(%arg0: i32, %arg1: i32, %arg2: i32) -> (i32, i32, i32) {
    %c0_i32 = arith.constant 0 : i32
    %c0_i32_0 = arith.constant 0 : i32
    return %arg0, %arg2, %c0_i32 : i32, i32, i32
  }
  func.func @transform_3(%arg0: i32, %arg1: i32, %arg2: i32) -> (i32, i32, i32) {
    %c0_i32 = arith.constant 0 : i32
    %c0_i32_0 = arith.constant 0 : i32
    return %arg0, %arg1, %c0_i32 : i32, i32, i32
  }
}

module attributes {stable_mosaic.version = 11 : i64} {
  func.func @attn_proj_kernel(%arg0: i32, %arg1: i32, %arg2: i32, %arg3: i32, %arg4: memref<1x8x8xbf16, #tpu.memory_space<vmem>>, %arg5: memref<1x8x32xbf16, #tpu.memory_space<vmem>>, %arg6: memref<1x32xbf16, #tpu.memory_space<vmem>>, %arg7: memref<8x32xbf16, #tpu.memory_space<vmem>>, %arg8: memref<8x32xf32, #tpu.memory_space<vmem>>) attributes {dimension_semantics = [#tpu.dimension_semantics<parallel>, #tpu.dimension_semantics<parallel>, #tpu.dimension_semantics<parallel>, #tpu.dimension_semantics<arbitrary>], iteration_bounds = array<i64: 2, 1, 1, 4>, scalar_prefetch = 0 : i64, scratch_operands = 1 : i64, tpu.core_type = #tpu.core_type<tc>, window_params = [{transform_indices = @transform_0, window_bounds = array<i64: 1, 8, 8>}, {transform_indices = @transform_1, window_bounds = array<i64: 1, 8, 32>}, {transform_indices = @transform_2, window_bounds = array<i64: 1, 32>}, {transform_indices = @transform_3, window_bounds = array<i64: 8, 32>}]} {
    %c0_i32 = arith.constant 0 : i32
    %0 = arith.cmpi eq, %arg3, %c0_i32 : i32
    %1 = arith.extui %0 : i1 to i32
    %c0_i32_0 = arith.constant 0 : i32
    %2 = arith.cmpi ne, %1, %c0_i32_0 : i32
    scf.if %2 {
      %cst_11 = arith.constant 0.000000e+00 : f32
      %14 = vector.broadcast %cst_11 : f32 to vector<8x32xf32>
      %c0_12 = arith.constant 0 : index
      %c0_13 = arith.constant 0 : index
      %15 = vector.load %arg8[%c0_12, %c0_13] : memref<8x32xf32, #tpu.memory_space<vmem>>, vector<8x32xf32>
      tpu.vector_store %arg8[%c0_12, %c0_13], %14 {strides = array<i32>} : memref<8x32xf32, #tpu.memory_space<vmem>>, vector<8x32xf32>,
    } else {
    }
    %c0 = arith.constant 0 : index
    %c0_1 = arith.constant 0 : index
    %3 = vector.load %arg8[%c0, %c0_1] : memref<8x32xf32, #tpu.memory_space<vmem>>, vector<8x32xf32>
    %c0_2 = arith.constant 0 : index
    %c0_3 = arith.constant 0 : index
    %c0_4 = arith.constant 0 : index
    %4 = vector.load %arg4[%c0_2, %c0_3, %c0_4] : memref<1x8x8xbf16, #tpu.memory_space<vmem>>, vector<1x8x8xbf16>
    %5 = vector.shape_cast %4 : vector<1x8x8xbf16> to vector<8x8xbf16>
    %c0_5 = arith.constant 0 : index
    %c0_6 = arith.constant 0 : index
    %c0_7 = arith.constant 0 : index
    %6 = vector.load %arg5[%c0_5, %c0_6, %c0_7] : memref<1x8x32xbf16, #tpu.memory_space<vmem>>, vector<1x8x32xbf16>
    %7 = vector.shape_cast %6 : vector<1x8x32xbf16> to vector<8x32xbf16>
    %cst = arith.constant dense<0.000000e+00> : vector<8x32xf32>
    %8 = tpu.matmul %5, %7, %cst {dimension_numbers = #tpu.dot_dimension_numbers<[1], [0], [0], [1], [0, 0, 1, 1], [], []>} : vector<8x8xbf16>, vector<8x32xbf16>, vector<8x32xf32> -> vector<8x32xf32>
    %9 = arith.addf %3, %8 : vector<8x32xf32>
    %c0_8 = arith.constant 0 : index
    %c0_9 = arith.constant 0 : index
    %10 = vector.load %arg8[%c0_8, %c0_9] : memref<8x32xf32, #tpu.memory_space<vmem>>, vector<8x32xf32>
    tpu.vector_store %arg8[%c0_8, %c0_9], %9 {strides = array<i32>} : memref<8x32xf32, #tpu.memory_space<vmem>>, vector<8x32xf32>,
    %c3_i32 = arith.constant 3 : i32
    %11 = arith.cmpi eq, %arg3, %c3_i32 : i32
    %12 = arith.extui %11 : i1 to i32
    %c0_i32_10 = arith.constant 0 : i32
    %13 = arith.cmpi ne, %12, %c0_i32_10 : i32
    scf.if %13 {
      %c0_11 = arith.constant 0 : index
      %c0_12 = arith.constant 0 : index
      %14 = vector.load %arg8[%c0_11, %c0_12] : memref<8x32xf32, #tpu.memory_space<vmem>>, vector<8x32xf32>
      %c0_13 = arith.constant 0 : index
      %c0_14 = arith.constant 0 : index
      %15 = vector.load %arg6[%c0_13, %c0_14] : memref<1x32xbf16, #tpu.memory_space<vmem>>, vector<1x32xbf16>
      %16 = arith.extf %15 : vector<1x32xbf16> to vector<1x32xf32>
      %17 = vector.broadcast %16 : vector<1x32xf32> to vector<8x32xf32>
      %18 = arith.addf %14, %17 : vector<8x32xf32>
      %19 = arith.truncf %18 : vector<8x32xf32> to vector<8x32xbf16>
      %c0_15 = arith.constant 0 : index
      %c0_16 = arith.constant 0 : index
      %20 = vector.load %arg7[%c0_15, %c0_16] : memref<8x32xbf16, #tpu.memory_space<vmem>>, vector<8x32xbf16>
      tpu.vector_store %arg7[%c0_15, %c0_16], %19 {strides = array<i32>} : memref<8x32xbf16, #tpu.memory_space<vmem>>, vector<8x32xbf16>,
    } else {
    }
    return
  }
  func.func @transform_0(%arg0: i32, %arg1: i32, %arg2: i32, %arg3: i32) -> (i32, i32, i32) {
    %c4_i32 = arith.constant 4 : i32
    %0 = arith.muli %arg0, %c4_i32 : i32
    %1 = arith.addi %0, %arg3 : i32
    %c0_i32 = arith.constant 0 : i32
    %c0_i32_0 = arith.constant 0 : i32
    return %1, %arg1, %c0_i32 : i32, i32, i32
  }
  func.func @transform_1(%arg0: i32, %arg1: i32, %arg2: i32, %arg3: i32) -> (i32, i32, i32) {
    %c0_i32 = arith.constant 0 : i32
    %c0_i32_0 = arith.constant 0 : i32
    return %arg3, %c0_i32, %arg2 : i32, i32, i32
  }
  func.func @transform_2(%arg0: i32, %arg1: i32, %arg2: i32, %arg3: i32) -> (i32, i32) {
    %c0_i32 = arith.constant 0 : i32
    %c0_i32_0 = arith.constant 0 : i32
    return %c0_i32, %arg2 : i32, i32
  }
  func.func @transform_3(%arg0: i32, %arg1: i32, %arg2: i32, %arg3: i32) -> (i32, i32) {
    %c1_i32 = arith.constant 1 : i32
    %0 = arith.muli %arg0, %c1_i32 : i32
    %1 = arith.addi %0, %arg1 : i32
    %c0_i32 = arith.constant 0 : i32
    return %1, %arg2 : i32, i32
  }
}

module attributes {stable_mosaic.version = 11 : i64} {
  func.func @mlp_kernel(%arg0: i32, %arg1: i32, %arg2: memref<16x32xbf16, #tpu.memory_space<vmem>>, %arg3: memref<32x128xbf16, #tpu.memory_space<vmem>>, %arg4: memref<1x128xbf16, #tpu.memory_space<vmem>>, %arg5: memref<128x32xbf16, #tpu.memory_space<vmem>>, %arg6: memref<1x32xbf16, #tpu.memory_space<vmem>>, %arg7: memref<16x32xbf16, #tpu.memory_space<vmem>>, %arg8: memref<16x32xf32, #tpu.memory_space<vmem>>) attributes {dimension_semantics = [#tpu.dimension_semantics<parallel>, #tpu.dimension_semantics<arbitrary>], iteration_bounds = array<i64: 1, 1>, scalar_prefetch = 0 : i64, scratch_operands = 1 : i64, tpu.core_type = #tpu.core_type<tc>, window_params = [{transform_indices = @transform_0, window_bounds = array<i64: 16, 32>}, {transform_indices = @transform_1, window_bounds = array<i64: 32, 128>}, {transform_indices = @transform_2, window_bounds = array<i64: 1, 128>}, {transform_indices = @transform_3, window_bounds = array<i64: 128, 32>}, {pipeline_mode = #tpu.pipeline_mode<synchronous>, transform_indices = @transform_4, window_bounds = array<i64: 1, 32>}, {transform_indices = @transform_5, window_bounds = array<i64: 16, 32>}]} {
    %c0_i32 = arith.constant 0 : i32
    %0 = arith.cmpi eq, %arg1, %c0_i32 : i32
    %1 = arith.extui %0 : i1 to i32
    %c0_i32_0 = arith.constant 0 : i32
    %2 = arith.cmpi ne, %1, %c0_i32_0 : i32
    scf.if %2 {
      %cst_19 = arith.constant 0.000000e+00 : f32
      %32 = vector.broadcast %cst_19 : f32 to vector<16x32xf32>
      %c0_20 = arith.constant 0 : index
      %c0_21 = arith.constant 0 : index
      %33 = vector.load %arg8[%c0_20, %c0_21] : memref<16x32xf32, #tpu.memory_space<vmem>>, vector<16x32xf32>
      tpu.vector_store %arg8[%c0_20, %c0_21], %32 {strides = array<i32>} : memref<16x32xf32, #tpu.memory_space<vmem>>, vector<16x32xf32>,
    } else {
    }
    %c0 = arith.constant 0 : index
    %c0_1 = arith.constant 0 : index
    %3 = vector.load %arg2[%c0, %c0_1] : memref<16x32xbf16, #tpu.memory_space<vmem>>, vector<16x32xbf16>
    %c0_2 = arith.constant 0 : index
    %c0_3 = arith.constant 0 : index
    %4 = vector.load %arg3[%c0_2, %c0_3] : memref<32x128xbf16, #tpu.memory_space<vmem>>, vector<32x128xbf16>
    %cst = arith.constant dense<0.000000e+00> : vector<16x128xf32>
    %5 = tpu.matmul %3, %4, %cst {dimension_numbers = #tpu.dot_dimension_numbers<[1], [0], [0], [1], [0, 0, 1, 1], [], []>} : vector<16x32xbf16>, vector<32x128xbf16>, vector<16x128xf32> -> vector<16x128xf32>
    %c0_4 = arith.constant 0 : index
    %c0_5 = arith.constant 0 : index
    %6 = vector.load %arg4[%c0_4, %c0_5] : memref<1x128xbf16, #tpu.memory_space<vmem>>, vector<1x128xbf16>
    %7 = arith.extf %6 : vector<1x128xbf16> to vector<1x128xf32>
    %8 = vector.broadcast %7 : vector<1x128xf32> to vector<16x128xf32>
    %9 = arith.addf %5, %8 : vector<16x128xf32>
    %cst_6 = arith.constant 5.000000e-01 : f32
    %10 = vector.broadcast %cst_6 : f32 to vector<16x128xf32>
    %11 = arith.mulf %10, %9 : vector<16x128xf32>
    %cst_7 = arith.constant 4.471500e-02 : f32
    %12 = vector.broadcast %cst_7 : f32 to vector<16x128xf32>
    %13 = arith.mulf %12, %9 : vector<16x128xf32>
    %14 = arith.mulf %13, %9 : vector<16x128xf32>
    %15 = arith.mulf %14, %9 : vector<16x128xf32>
    %16 = arith.addf %9, %15 : vector<16x128xf32>
    %cst_8 = arith.constant 0.797884583 : f32
    %17 = vector.broadcast %cst_8 : f32 to vector<16x128xf32>
    %18 = arith.mulf %17, %16 : vector<16x128xf32>
    %19 = math.tanh %18 : vector<16x128xf32>
    %cst_9 = arith.constant 1.000000e+00 : f32
    %20 = vector.broadcast %cst_9 : f32 to vector<16x128xf32>
    %21 = arith.addf %20, %19 : vector<16x128xf32>
    %22 = arith.mulf %11, %21 : vector<16x128xf32>
    %c0_10 = arith.constant 0 : index
    %c0_11 = arith.constant 0 : index
    %23 = vector.load %arg8[%c0_10, %c0_11] : memref<16x32xf32, #tpu.memory_space<vmem>>, vector<16x32xf32>
    %24 = arith.truncf %22 : vector<16x128xf32> to vector<16x128xbf16>
    %c0_12 = arith.constant 0 : index
    %c0_13 = arith.constant 0 : index
    %25 = vector.load %arg5[%c0_12, %c0_13] : memref<128x32xbf16, #tpu.memory_space<vmem>>, vector<128x32xbf16>
    %cst_14 = arith.constant dense<0.000000e+00> : vector<16x32xf32>
    %26 = tpu.matmul %24, %25, %cst_14 {dimension_numbers = #tpu.dot_dimension_numbers<[1], [0], [0], [1], [0, 0, 1, 1], [], []>} : vector<16x128xbf16>, vector<128x32xbf16>, vector<16x32xf32> -> vector<16x32xf32>
    %27 = arith.addf %23, %26 : vector<16x32xf32>
    %c0_15 = arith.constant 0 : index
    %c0_16 = arith.constant 0 : index
    %28 = vector.load %arg8[%c0_15, %c0_16] : memref<16x32xf32, #tpu.memory_space<vmem>>, vector<16x32xf32>
    tpu.vector_store %arg8[%c0_15, %c0_16], %27 {strides = array<i32>} : memref<16x32xf32, #tpu.memory_space<vmem>>, vector<16x32xf32>,
    %c0_i32_17 = arith.constant 0 : i32
    %29 = arith.cmpi eq, %arg1, %c0_i32_17 : i32
    %30 = arith.extui %29 : i1 to i32
    %c0_i32_18 = arith.constant 0 : i32
    %31 = arith.cmpi ne, %30, %c0_i32_18 : i32
    scf.if %31 {
      %c0_19 = arith.constant 0 : index
      %c0_20 = arith.constant 0 : index
      %32 = vector.load %arg8[%c0_19, %c0_20] : memref<16x32xf32, #tpu.memory_space<vmem>>, vector<16x32xf32>
      %c0_21 = arith.constant 0 : index
      %c0_22 = arith.constant 0 : index
      %33 = vector.load %arg6[%c0_21, %c0_22] : memref<1x32xbf16, #tpu.memory_space<vmem>>, vector<1x32xbf16>
      %34 = arith.extf %33 : vector<1x32xbf16> to vector<1x32xf32>
      %35 = vector.broadcast %34 : vector<1x32xf32> to vector<16x32xf32>
      %36 = arith.addf %32, %35 : vector<16x32xf32>
      %37 = arith.truncf %36 : vector<16x32xf32> to vector<16x32xbf16>
      %c0_23 = arith.constant 0 : index
      %c0_24 = arith.constant 0 : index
      %38 = vector.load %arg7[%c0_23, %c0_24] : memref<16x32xbf16, #tpu.memory_space<vmem>>, vector<16x32xbf16>
      tpu.vector_store %arg7[%c0_23, %c0_24], %37 {strides = array<i32>} : memref<16x32xbf16, #tpu.memory_space<vmem>>, vector<16x32xbf16>,
    } else {
    }
    return
  }
  func.func @transform_0(%arg0: i32, %arg1: i32) -> (i32, i32) {
    %c0_i32 = arith.constant 0 : i32
    %c0_i32_0 = arith.constant 0 : i32
    return %arg0, %c0_i32 : i32, i32
  }
  func.func @transform_1(%arg0: i32, %arg1: i32) -> (i32, i32) {
    %c0_i32 = arith.constant 0 : i32
    %c0_i32_0 = arith.constant 0 : i32
    return %c0_i32, %arg1 : i32, i32
  }
  func.func @transform_2(%arg0: i32, %arg1: i32) -> (i32, i32) {
    %c0_i32 = arith.constant 0 : i32
    %c0_i32_0 = arith.constant 0 : i32
    return %c0_i32, %arg1 : i32, i32
  }
  func.func @transform_3(%arg0: i32, %arg1: i32) -> (i32, i32) {
    %c0_i32 = arith.constant 0 : i32
    %c0_i32_0 = arith.constant 0 : i32
    return %arg1, %c0_i32 : i32, i32
  }
  func.func @transform_4(%arg0: i32, %arg1: i32) -> (i32, i32) {
    %c0_i32 = arith.constant 0 : i32
    %c0_i32_0 = arith.constant 0 : i32
    %c0_i32_1 = arith.constant 0 : i32
    return %c0_i32, %c0_i32_0 : i32, i32
  }
  func.func @transform_5(%arg0: i32, %arg1: i32) -> (i32, i32) {
    %c0_i32 = arith.constant 0 : i32
    %c0_i32_0 = arith.constant 0 : i32
    return %arg0, %c0_i32 : i32, i32
  }
}

module attributes {stable_mosaic.version = 11 : i64} {
  func.func @add_layernorm_kernel(%arg0: i32, %arg1: memref<16x32xbf16, #tpu.memory_space<vmem>>, %arg2: memref<16x32xbf16, #tpu.memory_space<vmem>>, %arg3: memref<1x32xbf16, #tpu.memory_space<vmem>>, %arg4: memref<1x32xbf16, #tpu.memory_space<vmem>>, %arg5: memref<16x32xbf16, #tpu.memory_space<vmem>>, %arg6: memref<16x32xbf16, #tpu.memory_space<vmem>>) attributes {dimension_semantics = [#tpu.dimension_semantics<parallel>], iteration_bounds = array<i64: 1>, scalar_prefetch = 0 : i64, scratch_operands = 0 : i64, tpu.core_type = #tpu.core_type<tc>, window_params = [{transform_indices = @transform_0, window_bounds = array<i64: 16, 32>}, {transform_indices = @transform_1, window_bounds = array<i64: 16, 32>}, {pipeline_mode = #tpu.pipeline_mode<synchronous>, transform_indices = @transform_2, window_bounds = array<i64: 1, 32>}, {pipeline_mode = #tpu.pipeline_mode<synchronous>, transform_indices = @transform_3, window_bounds = array<i64: 1, 32>}, {transform_indices = @transform_4, window_bounds = array<i64: 16, 32>}, {transform_indices = @transform_5, window_bounds = array<i64: 16, 32>}]} {
    %c0 = arith.constant 0 : index
    %c0_0 = arith.constant 0 : index
    %0 = vector.load %arg1[%c0, %c0_0] : memref<16x32xbf16, #tpu.memory_space<vmem>>, vector<16x32xbf16>
    %1 = arith.extf %0 : vector<16x32xbf16> to vector<16x32xf32>
    %c0_1 = arith.constant 0 : index
    %c0_2 = arith.constant 0 : index
    %2 = vector.load %arg2[%c0_1, %c0_2] : memref<16x32xbf16, #tpu.memory_space<vmem>>, vector<16x32xbf16>
    %3 = arith.extf %2 : vector<16x32xbf16> to vector<16x32xf32>
    %4 = arith.addf %1, %3 : vector<16x32xf32>
    %5 = arith.truncf %4 : vector<16x32xf32> to vector<16x32xbf16>
    %c0_3 = arith.constant 0 : index
    %c0_4 = arith.constant 0 : index
    %6 = vector.load %arg5[%c0_3, %c0_4] : memref<16x32xbf16, #tpu.memory_space<vmem>>, vector<16x32xbf16>
    tpu.vector_store %arg5[%c0_3, %c0_4], %5 {strides = array<i32>} : memref<16x32xbf16, #tpu.memory_space<vmem>>, vector<16x32xbf16>,
    %cst = arith.constant dense<0.000000e+00> : vector<16xf32>
    %7 = vector.multi_reduction <add>, %4, %cst [1] : vector<16x32xf32> to vector<16xf32>
    %8 = vector.shape_cast %7 : vector<16xf32> to vector<16x1xf32>
    %cst_5 = arith.constant 3.200000e+01 : f32
    %9 = vector.broadcast %cst_5 : f32 to vector<16x1xf32>
    %10 = arith.divf %8, %9 : vector<16x1xf32>
    %11 = vector.broadcast %10 : vector<16x1xf32> to vector<16x32xf32>
    %12 = arith.subf %4, %11 : vector<16x32xf32>
    %13 = arith.mulf %12, %12 : vector<16x32xf32>
    %cst_6 = arith.constant dense<0.000000e+00> : vector<16xf32>
    %14 = vector.multi_reduction <add>, %13, %cst_6 [1] : vector<16x32xf32> to vector<16xf32>
    %15 = vector.shape_cast %14 : vector<16xf32> to vector<16x1xf32>
    %cst_7 = arith.constant 3.200000e+01 : f32
    %16 = vector.broadcast %cst_7 : f32 to vector<16x1xf32>
    %17 = arith.divf %15, %16 : vector<16x1xf32>
    %18 = vector.broadcast %10 : vector<16x1xf32> to vector<16x32xf32>
    %19 = arith.subf %4, %18 : vector<16x32xf32>
    %cst_8 = arith.constant 9.99999974E-6 : f32
    %20 = vector.broadcast %cst_8 : f32 to vector<16x1xf32>
    %21 = arith.addf %17, %20 : vector<16x1xf32>
    %22 = math.rsqrt %21 : vector<16x1xf32>
    %23 = vector.broadcast %22 : vector<16x1xf32> to vector<16x32xf32>
    %24 = arith.mulf %19, %23 : vector<16x32xf32>
    %c0_9 = arith.constant 0 : index
    %c0_10 = arith.constant 0 : index
    %25 = vector.load %arg3[%c0_9, %c0_10] : memref<1x32xbf16, #tpu.memory_space<vmem>>, vector<1x32xbf16>
    %26 = arith.extf %25 : vector<1x32xbf16> to vector<1x32xf32>
    %27 = vector.broadcast %26 : vector<1x32xf32> to vector<16x32xf32>
    %28 = arith.mulf %24, %27 : vector<16x32xf32>
    %c0_11 = arith.constant 0 : index
    %c0_12 = arith.constant 0 : index
    %29 = vector.load %arg4[%c0_11, %c0_12] : memref<1x32xbf16, #tpu.memory_space<vmem>>, vector<1x32xbf16>
    %30 = arith.extf %29 : vector<1x32xbf16> to vector<1x32xf32>
    %31 = vector.broadcast %30 : vector<1x32xf32> to vector<16x32xf32>
    %32 = arith.addf %28, %31 : vector<16x32xf32>
    %33 = arith.truncf %32 : vector<16x32xf32> to vector<16x32xbf16>
    %c0_13 = arith.constant 0 : index
    %c0_14 = arith.constant 0 : index
    %34 = vector.load %arg6[%c0_13, %c0_14] : memref<16x32xbf16, #tpu.memory_space<vmem>>, vector<16x32xbf16>
    tpu.vector_store %arg6[%c0_13, %c0_14], %33 {strides = array<i32>} : memref<16x32xbf16, #tpu.memory_space<vmem>>, vector<16x32xbf16>,
    return
  }
  func.func @transform_0(%arg0: i32) -> (i32, i32) {
    %c0_i32 = arith.constant 0 : i32
    %c0_i32_0 = arith.constant 0 : i32
    return %arg0, %c0_i32 : i32, i32
  }
  func.func @transform_1(%arg0: i32) -> (i32, i32) {
    %c0_i32 = arith.constant 0 : i32
    %c0_i32_0 = arith.constant 0 : i32
    return %arg0, %c0_i32 : i32, i32
  }
  func.func @transform_2(%arg0: i32) -> (i32, i32) {
    %c0_i32 = arith.constant 0 : i32
    %c0_i32_0 = arith.constant 0 : i32
    %c0_i32_1 = arith.constant 0 : i32
    return %c0_i32, %c0_i32_0 : i32, i32
  }
  func.func @transform_3(%arg0: i32) -> (i32, i32) {
    %c0_i32 = arith.constant 0 : i32
    %c0_i32_0 = arith.constant 0 : i32
    %c0_i32_1 = arith.constant 0 : i32
    return %c0_i32, %c0_i32_0 : i32, i32
  }
  func.func @transform_4(%arg0: i32) -> (i32, i32) {
    %c0_i32 = arith.constant 0 : i32
    %c0_i32_0 = arith.constant 0 : i32
    return %arg0, %c0_i32 : i32, i32
  }
  func.func @transform_5(%arg0: i32) -> (i32, i32) {
    %c0_i32 = arith.constant 0 : i32
    %c0_i32_0 = arith.constant 0 : i32
    return %arg0, %c0_i32 : i32, i32
  }
}

module attributes {stable_mosaic.version = 11 : i64} {
  func.func @linear_kernel(%arg0: i32, %arg1: i32, %arg2: i32, %arg3: memref<16x32xbf16, #tpu.memory_space<vmem>>, %arg4: memref<64x32xbf16, #tpu.memory_space<vmem>>, %arg5: memref<1x64xbf16, #tpu.memory_space<vmem>>, %arg6: memref<16x64xf32, #tpu.memory_space<vmem>>, %arg7: memref<16x64xf32, #tpu.memory_space<vmem>>) attributes {dimension_semantics = [#tpu.dimension_semantics<parallel>, #tpu.dimension_semantics<parallel>, #tpu.dimension_semantics<arbitrary>], iteration_bounds = array<i64: 1, 1, 1>, scalar_prefetch = 0 : i64, scratch_operands = 1 : i64, tpu.core_type = #tpu.core_type<tc>, window_params = [{transform_indices = @transform_0, window_bounds = array<i64: 16, 32>}, {transform_indices = @transform_1, window_bounds = array<i64: 64, 32>}, {transform_indices = @transform_2, window_bounds = array<i64: 1, 64>}, {transform_indices = @transform_3, window_bounds = array<i64: 16, 64>}]} {
    %c0_i32 = arith.constant 0 : i32
    %0 = arith.cmpi eq, %arg2, %c0_i32 : i32
    %1 = arith.extui %0 : i1 to i32
    %c0_i32_0 = arith.constant 0 : i32
    %2 = arith.cmpi ne, %1, %c0_i32_0 : i32
    scf.if %2 {
      %cst_10 = arith.constant 0.000000e+00 : f32
      %12 = vector.broadcast %cst_10 : f32 to vector<16x64xf32>
      %c0_11 = arith.constant 0 : index
      %c0_12 = arith.constant 0 : index
      %13 = vector.load %arg7[%c0_11, %c0_12] : memref<16x64xf32, #tpu.memory_space<vmem>>, vector<16x64xf32>
      tpu.vector_store %arg7[%c0_11, %c0_12], %12 {strides = array<i32>} : memref<16x64xf32, #tpu.memory_space<vmem>>, vector<16x64xf32>,
    } else {
    }
    %c0 = arith.constant 0 : index
    %c0_1 = arith.constant 0 : index
    %3 = vector.load %arg7[%c0, %c0_1] : memref<16x64xf32, #tpu.memory_space<vmem>>, vector<16x64xf32>
    %c0_2 = arith.constant 0 : index
    %c0_3 = arith.constant 0 : index
    %4 = vector.load %arg3[%c0_2, %c0_3] : memref<16x32xbf16, #tpu.memory_space<vmem>>, vector<16x32xbf16>
    %c0_4 = arith.constant 0 : index
    %c0_5 = arith.constant 0 : index
    %5 = vector.load %arg4[%c0_4, %c0_5] : memref<64x32xbf16, #tpu.memory_space<vmem>>, vector<64x32xbf16>
    %cst = arith.constant dense<0.000000e+00> : vector<16x64xf32>
    %6 = tpu.matmul %4, %5, %cst {dimension_numbers = #tpu.dot_dimension_numbers<[1], [1], [0], [0], [0, 0, 1, 0], [], []>} : vector<16x32xbf16>, vector<64x32xbf16>, vector<16x64xf32> -> vector<16x64xf32>
    %7 = arith.addf %3, %6 : vector<16x64xf32>
    %c0_6 = arith.constant 0 : index
    %c0_7 = arith.constant 0 : index
    %8 = vector.load %arg7[%c0_6, %c0_7] : memref<16x64xf32, #tpu.memory_space<vmem>>, vector<16x64xf32>
    tpu.vector_store %arg7[%c0_6, %c0_7], %7 {strides = array<i32>} : memref<16x64xf32, #tpu.memory_space<vmem>>, vector<16x64xf32>,
    %c0_i32_8 = arith.constant 0 : i32
    %9 = arith.cmpi eq, %arg2, %c0_i32_8 : i32
    %10 = arith.extui %9 : i1 to i32
    %c0_i32_9 = arith.constant 0 : i32
    %11 = arith.cmpi ne, %10, %c0_i32_9 : i32
    scf.if %11 {
      %c0_10 = arith.constant 0 : index
      %c0_11 = arith.constant 0 : index
      %12 = vector.load %arg7[%c0_10, %c0_11] : memref<16x64xf32, #tpu.memory_space<vmem>>, vector<16x64xf32>
      %c0_12 = arith.constant 0 : index
      %c0_13 = arith.constant 0 : index
      %13 = vector.load %arg5[%c0_12, %c0_13] : memref<1x64xbf16, #tpu.memory_space<vmem>>, vector<1x64xbf16>
      %14 = arith.extf %13 : vector<1x64xbf16> to vector<1x64xf32>
      %15 = vector.broadcast %14 : vector<1x64xf32> to vector<16x64xf32>
      %16 = arith.addf %12, %15 : vector<16x64xf32>
      %c0_14 = arith.constant 0 : index
      %c0_15 = arith.constant 0 : index
      %17 = vector.load %arg6[%c0_14, %c0_15] : memref<16x64xf32, #tpu.memory_space<vmem>>, vector<16x64xf32>
      tpu.vector_store %arg6[%c0_14, %c0_15], %16 {strides = array<i32>} : memref<16x64xf32, #tpu.memory_space<vmem>>, vector<16x64xf32>,
    } else {
    }
    return
  }
  func.func @transform_0(%arg0: i32, %arg1: i32, %arg2: i32) -> (i32, i32) {
    %c0_i32 = arith.constant 0 : i32
    return %arg0, %arg2 : i32, i32
  }
  func.func @transform_1(%arg0: i32, %arg1: i32, %arg2: i32) -> (i32, i32) {
    %c0_i32 = arith.constant 0 : i32
    return %arg1, %arg2 : i32, i32
  }
  func.func @transform_2(%arg0: i32, %arg1: i32, %arg2: i32) -> (i32, i32) {
    %c0_i32 = arith.constant 0 : i32
    %c0_i32_0 = arith.constant 0 : i32
    return %c0_i32, %arg1 : i32, i32
  }
  func.func @transform_3(%arg0: i32, %arg1: i32, %arg2: i32) -> (i32, i32) {
    %c0_i32 = arith.constant 0 : i32
    return %arg0, %arg1 : i32, i32
  }
}

</mosaic_0001>

<llo_original>
// kernel: gpt_pallas.15
$region0: #{gpt_pallas.15}
  #allocation0 [shape = 'u32[]', space=smem, size = 0x4, offset = 0x4, fixed_abs, tag = 'smem constant byte address 0x4 - core index']
  #allocation1 [shape = 'u32[144,128]{1,0:T(1,128)}', space=vmem, size = 0x12000, scoped, tag = 'internal scratch']
  #allocation2 [shape = 'f32[16,96]{1,0:T(8,128)}', space=vmem, size = 0x2000, scoped, tag = 'scratch operand']
  %s0 = inlined_call_operand.vmem [shape: bf16[16,32], index: 0, kind: input, shape index: {}]
  %s1 = inlined_call_operand.vmem [shape: bf16[32,96], index: 1, kind: input, shape index: {}]
  %s2 = inlined_call_operand.vmem [shape: bf16[1,96], index: 2, kind: input, shape index: {}]
  %s3 = inlined_call_operand.vmem [shape: bf16[16,96], index: 3, kind: output, shape index: {}]
  %s4 = sld [smem:[#allocation0]]
  $region30: #{gpt_pallas.15} parent=0
    _
  %s6 = ssub.s32 1, %s4
  %s7 = scalar_select 0, %s6, %s4
  // Predicated region
  $region2: #{gpt_pallas.15} parent=0 // pred_check
    _
  $region3: #{gpt_pallas.15} parent=0 // pred_check_branch
    %9 = sbr.rel (0) target = $region5
  $region4: #{gpt_pallas.15} parent=0 // pred_region
    _
  $region5: #{gpt_pallas.15} parent=0 // pred_fallthru
    _
  // Predicated region
  $region6: #{gpt_pallas.15} parent=0 // pred_check
    _
  $region7: #{gpt_pallas.15} parent=0 // pred_check_branch
    %11 = sbr.rel (0) target = $region9
  $region8: #{gpt_pallas.15} parent=0 // pred_region
    _
  $region9: #{gpt_pallas.15} parent=0 // pred_fallthru
    _
  // Predicated region
  $region10: #{gpt_pallas.15} parent=0 // pred_check
    _
  $region11: #{gpt_pallas.15} parent=0 // pred_check_branch
    %13 = sbr.rel (0) target = $region13
  $region12: #{gpt_pallas.15} parent=0 // pred_region
    _
  $region13: #{gpt_pallas.15} parent=0 // pred_fallthru
    _
  %p15 = scmp.eq.s32.totalorder 0, 0
  // Predicated region
  $region14: #{gpt_pallas.15} parent=0 // pred_check
    %p16 = pneg %p15
  $region15: #{gpt_pallas.15} parent=0 // pred_check_branch
    %18 = sbr.rel (%p16) target = $region17
  $region16: #{gpt_pallas.15} parent=0 // pred_region
    %vm19 = vcmask 785408
    %20 = vst.msk [vmem:[#allocation2] sm:$0xff] %vm19, 0.0
    %21 = vst.msk [vmem:[#allocation2 + $0x8] sm:$0xff] %vm19, 0.0
  $region17: #{gpt_pallas.15} parent=0 // pred_fallthru
    _
  %v22 = vld [vmem:[#allocation2] sm:$0xff]
  %v23 = vld [vmem:[#allocation2 + $0x8] sm:$0xff]
  %v24 = vld [vmem:[%s0] sm:$0xf]
  %v25 = vld [vmem:[%s0 + $0x4] sm:$0xf]
  %v26 = vld [vmem:[%s1] sm:$0xf]
  %v27 = vld [vmem:[%s1 + $0x4] sm:$0xf]
  %v28 = vld [vmem:[%s1 + $0x8] sm:$0xf]
  %v29 = vld [vmem:[%s1 + $0xc] sm:$0xf]
  %v32 = vunpack.c.l.b16 %v24
  %v33 = vunpack.c.l.b16 %v25
  %v34 = vpack.c.b16 %v33, %v32
  %v39 = vunpack.c.l.b16 %v26
  %v40 = vunpack.c.l.b16 %v27
  %v41 = vunpack.c.l.b16 %v28
  %v42 = vunpack.c.l.b16 %v29
  %v43 = vpack.c.b16 %v40, %v39
  %v44 = vpack.c.b16 %v42, %v41
  %vm47 = vcmask 261120
  %v49 = vsel %vm47, %v34, 0
  %51 = vmatprep.subr.bf16.mxu0 0
  %52 = vmatpush1.bf16.msra.mxu0 0
  %53 = vmatprep.subr.bf16.mxu0 0
  %54 = vmatpush1.bf16.msra.mxu0 0
  %55 = vmatprep.subr.bf16.mxu0 0
  %56 = vmatpush1.bf16.msra.mxu0 0
  %57 = vmatprep.subr.bf16.mxu0 0
  %58 = vmatpush1.bf16.msra.mxu0 0
  %59 = vmatprep.subr.bf16.mxu0 0
  %60 = vmatpush1.bf16.msra.mxu0 0
  %61 = vmatprep.subr.bf16.mxu0 0
  %62 = vmatpush1.bf16.msra.mxu0 0
  %63 = vmatprep.subr.bf16.mxu0 0
  %64 = vmatpush1.bf16.msra.mxu0 %v44
  %65 = vmatprep.subr.bf16.mxu0 0
  %66 = vmatpush1.bf16.msra.mxu0 %v43
  %67 = vmatprep.subr.bf16.mxu0 0
  %68 = vmatpush2.bf16.msra.mxu0 0
  %69 = vmatprep.subr.bf16.mxu0 0
  %70 = vmatpush2.bf16.msra.mxu0 0
  %71 = vmatprep.subr.bf16.mxu0 0
  %72 = vmatpush2.bf16.msra.mxu0 0
  %73 = vmatprep.subr.bf16.mxu0 0
  %74 = vmatpush2.bf16.msra.mxu0 0
  %75 = vmatprep.subr.bf16.mxu0 0
  %76 = vmatpush2.bf16.msra.mxu0 0
  %77 = vmatprep.subr.bf16.mxu0 0
  %78 = vmatpush2.bf16.msra.mxu0 0
  %79 = vmatprep.subr.bf16.mxu0 0
  %80 = vmatpush2.bf16.msra.mxu0 0
  %81 = vmatprep.subr.bf16.mxu0 0
  %82 = vmatpush2.bf16.msra.mxu0 0
  %83 = vmatprep.mubr.bf16.mxu0 0
  %84 = vmatmul.mubr.bf16.gmra.mxu0 %v49
  %v85 = vpop.f32.mrf.mxu0
  %v86 = vadd.f32 0.0, %v85
  %v87 = vpop.f32.mrf.mxu0
  %v88 = vpop.f32.mrf.mxu0
  %v89 = vadd.f32 0.0, %v88
  %v90 = vpop.f32.mrf.mxu0
  %91 = vdwg.mxu0
  %v92 = vadd.f32 %v22, %v86
  %v93 = vadd.f32 %v23, %v89
  %vm94 = vcmask 785408
  %95 = vst.msk [vmem:[#allocation2] sm:$0xff] %vm94, %v92
  %96 = vst.msk [vmem:[#allocation2 + $0x8] sm:$0xff] %vm94, %v93
  // Predicated region
  $region18: #{gpt_pallas.15} parent=0 // pred_check
    %p97 = pneg %p15
  $region19: #{gpt_pallas.15} parent=0 // pred_check_branch
    %99 = sbr.rel (%p97) target = $region21
  $region20: #{gpt_pallas.15} parent=0 // pred_region
    %v100 = vld [vmem:[#allocation2] sm:$0xff]
    %v101 = vld [vmem:[#allocation2 + $0x8] sm:$0xff]
    %v102 = vld [vmem:[%s2] sm:$0x1]
    %v103 = vunpack.c.l.bf16 %v102
    %v104 = vlaneseq
    %v105 = vshrl.u32 %v104, 7
    %v106 = vsub.s32 0, %v105
    %v107 = vrot.slane %v103, %v106
    %v108 = vadd.f32 %v100, %v107
    %v109 = vadd.f32 %v101, %v107
    %v110 = vpack.c.bf16 %v109, %v108
    %v112 = vunpack.c.l.b16 %v110
    %v113 = vunpack.c.h.b16 %v110
    %v114 = vpack.c.b16 %v112, %v112
    %v115 = vpack.c.b16 %v113, %v113
    %vm118 = vcmask 781312
    %119 = vst.msk [vmem:[%s3] sm:$0xf] %vm118, %v114
    %120 = vst.msk [vmem:[%s3 + $0x4] sm:$0xf] %vm118, %v115
  $region21: #{gpt_pallas.15} parent=0 // pred_fallthru
    _
  // Predicated region
  $region22: #{gpt_pallas.15} parent=0 // pred_check
    _
  $region23: #{gpt_pallas.15} parent=0 // pred_check_branch
    %122 = sbr.rel (0) target = $region25
  $region24: #{gpt_pallas.15} parent=0 // pred_region
    _
  $region25: #{gpt_pallas.15} parent=0 // pred_fallthru
    _
  // Predicated region
  $region26: #{gpt_pallas.15} parent=0 // pred_check
    _
  $region27: #{gpt_pallas.15} parent=0 // pred_check_branch
    %124 = sbr.rel (0) target = $region29
  $region28: #{gpt_pallas.15} parent=0 // pred_region
    _
  $region29: #{gpt_pallas.15} parent=0 // pred_fallthru
    _

// kernel: gpt_pallas.14
$region0: #{gpt_pallas.14}
  #allocation0 [shape = 'u32[]', space=smem, size = 0x4, offset = 0x4, fixed_abs, tag = 'smem constant byte address 0x4 - core index']
  #allocation1 [shape = 'u32[144,128]{1,0:T(1,128)}', space=vmem, size = 0x12000, scoped, tag = 'internal scratch']
  %s0 = inlined_call_operand.vmem [shape: bf16[16,32], index: 0, kind: input, shape index: {}]
  %s1 = inlined_call_operand.vmem [shape: bf16[16,32], index: 1, kind: input, shape index: {}]
  %s2 = inlined_call_operand.vmem [shape: bf16[1,32], index: 2, kind: input, shape index: {}]
  %s3 = inlined_call_operand.vmem [shape: bf16[1,32], index: 3, kind: input, shape index: {}]
  %s4 = inlined_call_operand.vmem [shape: bf16[16,32], index: 4, kind: output, shape index: {0}]
  %s5 = inlined_call_operand.vmem [shape: bf16[16,32], index: 5, kind: output, shape index: {1}]
  %6 = xla_tuple %s4, %s5
  %s7 = sld [smem:[#allocation0]]
  $region34: #{gpt_pallas.14} parent=0
    _
  %s9 = ssub.s32 1, %s7
  %s10 = scalar_select 0, %s9, %s7
  // Predicated region
  $region2: #{gpt_pallas.14} parent=0 // pred_check
    _
  $region3: #{gpt_pallas.14} parent=0 // pred_check_branch
    %12 = sbr.rel (0) target = $region5
  $region4: #{gpt_pallas.14} parent=0 // pred_region
    _
  $region5: #{gpt_pallas.14} parent=0 // pred_fallthru
    _
  // Predicated region
  $region6: #{gpt_pallas.14} parent=0 // pred_check
    _
  $region7: #{gpt_pallas.14} parent=0 // pred_check_branch
    %14 = sbr.rel (0) target = $region9
  $region8: #{gpt_pallas.14} parent=0 // pred_region
    _
  $region9: #{gpt_pallas.14} parent=0 // pred_fallthru
    _
  // Predicated region
  $region10: #{gpt_pallas.14} parent=0 // pred_check
    _
  $region11: #{gpt_pallas.14} parent=0 // pred_check_branch
    %16 = sbr.rel (0) target = $region13
  $region12: #{gpt_pallas.14} parent=0 // pred_region
    _
  $region13: #{gpt_pallas.14} parent=0 // pred_fallthru
    _
  // Predicated region
  $region14: #{gpt_pallas.14} parent=0 // pred_check
    _
  $region15: #{gpt_pallas.14} parent=0 // pred_check_branch
    %18 = sbr.rel (0) target = $region17
  $region16: #{gpt_pallas.14} parent=0 // pred_region
    _
  $region17: #{gpt_pallas.14} parent=0 // pred_fallthru
    _
  %v19 = vld [vmem:[%s0] sm:$0xf]
  %v20 = vld [vmem:[%s0 + $0x4] sm:$0xf]
  %v21 = vunpack.c.l.bf16 %v19
  %v22 = vunpack.c.l.bf16 %v20
  %v23 = vld [vmem:[%s1] sm:$0xf]
  %v24 = vld [vmem:[%s1 + $0x4] sm:$0xf]
  %v25 = vunpack.c.l.bf16 %v23
  %v26 = vunpack.c.l.bf16 %v24
  %v27 = vadd.f32 %v21, %v25
  %v28 = vadd.f32 %v22, %v26
  %v29 = vpack.c.bf16 %v28, %v27
  %v31 = vunpack.c.l.b16 %v29
  %v32 = vunpack.c.h.b16 %v29
  %v33 = vpack.c.b16 %v31, %v31
  %v34 = vpack.c.b16 %v32, %v32
  %vm37 = vcmask 257024
  %38 = vst.msk [vmem:[%s4] sm:$0xf] %vm37, %v33
  %39 = vst.msk [vmem:[%s4 + $0x4] sm:$0xf] %vm37, %v34
  %vm40 = vcmask 261120
  %v41 = vsel %vm40, %v27, 0.0
  %42 = vadd.xlane.f32.xlu0 %v41
  %v43 = vpop.xlane.xlu0 %42
  %v44 = vsel %vm40, %v28, 0.0
  %45 = vadd.xlane.f32.xlu0 %v44
  %v46 = vpop.xlane.xlu0 %45
  %v47 = vrcp.pop 32.0
  %v48 = vmul.f32 %v43, %v47
  %v49 = vmul.f32 %v46, %v47
  %v50 = vsub.f32 %v27, %v48
  %v51 = vsub.f32 %v28, %v49
  %v52 = vmul.f32 %v50, %v50
  %v53 = vmul.f32 %v51, %v51
  %v54 = vsel %vm40, %v52, 0.0
  %55 = vadd.xlane.f32.xlu0 %v54
  %v56 = vpop.xlane.xlu0 %55
  %v57 = vsel %vm40, %v53, 0.0
  %58 = vadd.xlane.f32.xlu0 %v57
  %v59 = vpop.xlane.xlu0 %58
  %v60 = vmul.f32 %v56, %v47
  %v61 = vmul.f32 %v59, %v47
  %v62 = vadd.f32 %v60, 1e-05
  %v63 = vadd.f32 %v61, 1e-05
  %v64 = vrsqrt.pop %v62
  %v65 = vrsqrt.pop %v63
  %v66 = vmul.f32 %v50, %v64
  %v67 = vmul.f32 %v51, %v65
  %v68 = vld [vmem:[%s2] sm:$0x1]
  %v69 = vunpack.c.l.bf16 %v68
  %v70 = vlaneseq
  %v71 = vshrl.u32 %v70, 7
  %v72 = vsub.s32 0, %v71
  %v73 = vrot.slane %v69, %v72
  %v74 = vmul.f32 %v66, %v73
  %v75 = vmul.f32 %v67, %v73
  %v76 = vld [vmem:[%s3] sm:$0x1]
  %v77 = vunpack.c.l.bf16 %v76
  %v78 = vlaneseq
  %v79 = vshrl.u32 %v78, 7
  %v80 = vsub.s32 0, %v79
  %v81 = vrot.slane %v77, %v80
  %v82 = vadd.f32 %v74, %v81
  %v83 = vadd.f32 %v75, %v81
  %v84 = vpack.c.bf16 %v83, %v82
  %v86 = vunpack.c.l.b16 %v84
  %v87 = vunpack.c.h.b16 %v84
  %v88 = vpack.c.b16 %v86, %v86
  %v89 = vpack.c.b16 %v87, %v87
  %92 = vst.msk [vmem:[%s5] sm:$0xf] %vm37, %v88
  %93 = vst.msk [vmem:[%s5 + $0x4] sm:$0xf] %vm37, %v89
  // Predicated region
  $region18: #{gpt_pallas.14} parent=0 // pred_check
    _
  $region19: #{gpt_pallas.14} parent=0 // pred_check_branch
    %95 = sbr.rel (0) target = $region21
  $region20: #{gpt_pallas.14} parent=0 // pred_region
    _
  $region21: #{gpt_pallas.14} parent=0 // pred_fallthru
    _
  // Predicated region
  $region22: #{gpt_pallas.14} parent=0 // pred_check
    _
  $region23: #{gpt_pallas.14} parent=0 // pred_check_branch
    %97 = sbr.rel (0) target = $region25
  $region24: #{gpt_pallas.14} parent=0 // pred_region
    _
  $region25: #{gpt_pallas.14} parent=0 // pred_fallthru
    _
  // Predicated region
  $region26: #{gpt_pallas.14} parent=0 // pred_check
    _
  $region27: #{gpt_pallas.14} parent=0 // pred_check_branch
    %99 = sbr.rel (0) target = $region29
  $region28: #{gpt_pallas.14} parent=0 // pred_region
    _
  $region29: #{gpt_pallas.14} parent=0 // pred_fallthru
    _
  // Predicated region
  $region30: #{gpt_pallas.14} parent=0 // pred_check
    _
  $region31: #{gpt_pallas.14} parent=0 // pred_check_branch
    %101 = sbr.rel (0) target = $region33
  $region32: #{gpt_pallas.14} parent=0 // pred_region
    _
  $region33: #{gpt_pallas.14} parent=0 // pred_fallthru
    _

// kernel: gpt_pallas.17
$region0: #{gpt_pallas.17}
  #allocation0 [shape = 'u32[]', space=smem, size = 0x4, offset = 0x4, fixed_abs, tag = 'smem constant byte address 0x4 - core index']
  #allocation1 [shape = 'u32[144,128]{1,0:T(1,128)}', space=vmem, size = 0x12000, scoped, tag = 'internal scratch']
  #allocation2 [shape = 'f32[8,32]{1,0:T(8,128)}', space=vmem, size = 0x1000, scoped, tag = 'scratch operand']
  %s0 = inlined_call_operand.vmem [shape: bf16[8,8,8], index: 0, kind: input, shape index: {}]
  %s1 = inlined_call_operand.vmem [shape: bf16[4,8,32], index: 1, kind: input, shape index: {}]
  %s2 = inlined_call_operand.vmem [shape: bf16[1,32], index: 2, kind: input, shape index: {}]
  %s3 = inlined_call_operand.vmem [shape: bf16[16,32], index: 3, kind: output, shape index: {}]
  %s4 = sld [smem:[#allocation0]]
  $region53: #{gpt_pallas.17} parent=0
    _
  %s6 = ssub.s32 1, %s4
  %s7 = scalar_select 0, %s6, %s4
  loop: start=0, step=1, limit=10
  $region2: #{gpt_pallas.17} parent=0 // loop_pre_header
    _
  $region3: #{gpt_pallas.17} parent=0 // loop_header
    %s9 = sphi 0, %s13
    %p10 = scmp.ge.s32.totalorder %s9, 10
    %s16 = sphi 0, %s42
    %s17 = sphi 0, %s38
    %s18 = sphi 0, %s34
    %s19 = sphi 0, %s30
    %s20 = sphi 0, %s16
    %s21 = sphi 0, %s17
    %s22 = sphi 0, %s18
    %s23 = sphi 0, %s19
    %s24 = sphi 0, %s20
    %s25 = sphi 0, %s21
    %s26 = sphi 0, %s22
    %s27 = sphi 0, %s23
    %s51 = sphi 0, %s53
    %s54 = sphi 0, %s51
    %s55 = sphi 0, %s54
    %s71 = sphi 0, %s55
    %s79 = sphi 0, %s81
    %s82 = sphi 0, %s79
    %s83 = sphi 0, %s82
    %s99 = sphi 0, %s83
    %s105 = sphi 0, %s107
    %s108 = sphi 0, %s105
    %s109 = sphi 0, %s108
    %s125 = sphi 0, %s109
    %s135 = sphi 0, %s137
    %s138 = sphi 0, %s135
    %s139 = sphi 0, %s138
    %s155 = sphi 0, %s139
  $region4: #{gpt_pallas.17} parent=0 // loop_header_branch
    %12 = sbr.rel (%p10) target = $region8
  $region5: #{gpt_pallas.17} parent=0 // loop_body
    %s14 = ssub.s32 %s9, 1
    %s15 = ssub.s32 %s9, 2
    %s28 = sadd.s32 1, %s19
    %p29 = scmp.ge.s32.totalorder %s28, 4
    %s30 = scalar_select %p29, 0, %s28
    %s31 = sadd.s32 1, %s18
    %s32 = scalar_select %p29, %s31, %s18
    %p33 = scmp.ge.s32.totalorder %s32, 1
    %s34 = scalar_select %p33, 0, %s32
    %s35 = sadd.s32 1, %s17
    %s36 = scalar_select %p33, %s35, %s17
    %p37 = scmp.ge.s32.totalorder %s36, 1
    %s38 = scalar_select %p37, 0, %s36
    %s39 = sadd.s32 1, %s16
    %s40 = scalar_select %p37, %s39, %s16
    %p41 = scmp.ge.s32.totalorder %s40, 2
    %s42 = scalar_select %p41, 0, %s40
    %s43 = smul.u32 %s16, 4
    %s44 = sadd.s32 %s43, %s19
    %s45 = smul.u32 %s42, 4
    %s46 = sadd.s32 %s45, %s30
    %s47 = ssub.s32 %s44, %s46
    %s48 = ssub.s32 %s17, %s38
    %s49 = sor.u32 %s47, %s48
    %p50 = scmp.eq.s32.totalorder %s49, 0
    %s52 = sadd.s32 %s51, 1
    %s53 = scalar_select %p50, %s51, %s52
    %p56 = pneg %p50
    %p57 = scmp.eq.s32.totalorder %s9, 7
    %p58 = por %p56, %p57
    %p59 = scmp.ne.s32.totalorder %s51, %s54
    %p60 = scmp.eq.s32.totalorder %s9, 0
    %p61 = por %p59, %p60
    %p62 = scmp.ne.s32.totalorder %s51, %s54
    %p63 = scmp.eq.s32.totalorder %s14, 7
    %p64 = por %p62, %p63
    %p65 = scmp.ne.s32.totalorder %s54, %s55
    %p66 = scmp.eq.s32.totalorder %s14, 0
    %p67 = por %p65, %p66
    %p68 = scmp.ne.s32.totalorder %s54, %s55
    %p69 = scmp.eq.s32.totalorder %s15, 7
    %p70 = por %p68, %p69
    %p72 = scmp.ne.s32.totalorder %s55, %s71
    %p73 = scmp.eq.s32.totalorder %s15, 0
    %p74 = por %p72, %p73
    %s75 = ssub.s32 %s19, %s30
    %s76 = ssub.s32 %s18, %s34
    %s77 = sor.u32 %s75, %s76
    %p78 = scmp.eq.s32.totalorder %s77, 0
    %s80 = sadd.s32 %s79, 1
    %s81 = scalar_select %p78, %s79, %s80
    %p84 = pneg %p78
    %p85 = scmp.eq.s32.totalorder %s9, 7
    %p86 = por %p84, %p85
    %p87 = scmp.ne.s32.totalorder %s79, %s82
    %p88 = scmp.eq.s32.totalorder %s9, 0
    %p89 = por %p87, %p88
    %p90 = scmp.ne.s32.totalorder %s79, %s82
    %p91 = scmp.eq.s32.totalorder %s14, 7
    %p92 = por %p90, %p91
    %p93 = scmp.ne.s32.totalorder %s82, %s83
    %p94 = scmp.eq.s32.totalorder %s14, 0
    %p95 = por %p93, %p94
    %p96 = scmp.ne.s32.totalorder %s82, %s83
    %p97 = scmp.eq.s32.totalorder %s15, 7
    %p98 = por %p96, %p97
    %p100 = scmp.ne.s32.totalorder %s83, %s99
    %p101 = scmp.eq.s32.totalorder %s15, 0
    %p102 = por %p100, %p101
    %s103 = ssub.s32 %s18, %s34
    %p104 = scmp.eq.s32.totalorder %s103, 0
    %s106 = sadd.s32 %s105, 1
    %s107 = scalar_select %p104, %s105, %s106
    %p110 = pneg %p104
    %p111 = scmp.eq.s32.totalorder %s9, 7
    %p112 = por %p110, %p111
    %p113 = scmp.ne.s32.totalorder %s105, %s108
    %p114 = scmp.eq.s32.totalorder %s9, 0
    %p115 = por %p113, %p114
    %p116 = scmp.ne.s32.totalorder %s105, %s108
    %p117 = scmp.eq.s32.totalorder %s14, 7
    %p118 = por %p116, %p117
    %p119 = scmp.ne.s32.totalorder %s108, %s109
    %p120 = scmp.eq.s32.totalorder %s14, 0
    %p121 = por %p119, %p120
    %p122 = scmp.ne.s32.totalorder %s108, %s109
    %p123 = scmp.eq.s32.totalorder %s15, 7
    %p124 = por %p122, %p123
    %p126 = scmp.ne.s32.totalorder %s109, %s125
    %p127 = scmp.eq.s32.totalorder %s15, 0
    %p128 = por %p126, %p127
    %s129 = sadd.s32 %s16, %s17
    %s130 = sadd.s32 %s42, %s38
    %s131 = ssub.s32 %s129, %s130
    %s132 = ssub.s32 %s18, %s34
    %s133 = sor.u32 %s131, %s132
    %p134 = scmp.eq.s32.totalorder %s133, 0
    %s136 = sadd.s32 %s135, 1
    %s137 = scalar_select %p134, %s135, %s136
    %p140 = pneg %p134
    %p141 = scmp.eq.s32.totalorder %s9, 7
    %p142 = por %p140, %p141
    %p143 = scmp.ne.s32.totalorder %s135, %s138
    %p144 = scmp.eq.s32.totalorder %s9, 0
    %p145 = por %p143, %p144
    %p146 = scmp.ne.s32.totalorder %s135, %s138
    %p147 = scmp.eq.s32.totalorder %s14, 7
    %p148 = por %p146, %p147
    %p149 = scmp.ne.s32.totalorder %s138, %s139
    %p150 = scmp.eq.s32.totalorder %s14, 0
    %p151 = por %p149, %p150
    %p152 = scmp.ne.s32.totalorder %s138, %s139
    %p153 = scmp.eq.s32.totalorder %s15, 7
    %p154 = por %p152, %p153
    %p156 = scmp.ne.s32.totalorder %s139, %s155
    %p157 = scmp.eq.s32.totalorder %s15, 0
    %p158 = por %p156, %p157
    %p159 = scmp.le.s32.totalorder 1, %s9
    %p160 = scmp.lt.s32.totalorder %s9, 9
    %p161 = pnand %p159, %p160
    %p162 = pneg %p161
    // Predicated region
    $region9: #{gpt_pallas.17} parent=5 // pred_check
      _
    $region10: #{gpt_pallas.17} parent=5 // pred_check_branch
      %164 = sbr.rel (%p161) target = $region12
    $region11: #{gpt_pallas.17} parent=5 // pred_region
      %s165 = ssub.s32 %s9, 1
      // Predicated region
      $region13: #{gpt_pallas.17} parent=11 // pred_check
        %p166 = pneg %p121
      $region14: #{gpt_pallas.17} parent=11 // pred_check_branch
        %168 = sbr.rel (%p166) target = $region16
      $region15: #{gpt_pallas.17} parent=11 // pred_region
        %p169 = scmp.lt.s32.totalorder %s22, 0
        %s170 = scalar_select %p169, %s22, 0
        %s171 = scalar_lea.vmem %s2, %s170
      $region16: #{gpt_pallas.17} parent=11 // pred_fallthru
        _
    $region12: #{gpt_pallas.17} parent=5 // pred_fallthru
      _
    %p172 = scmp.lt.s32.totalorder %s9, 8
    // Predicated region
    $region17: #{gpt_pallas.17} parent=5 // pred_check
      %p173 = pneg %p172
    $region18: #{gpt_pallas.17} parent=5 // pred_check_branch
      %175 = sbr.rel (%p173) target = $region20
    $region19: #{gpt_pallas.17} parent=5 // pred_region
      // Predicated region
      $region21: #{gpt_pallas.17} parent=19 // pred_check
        %p176 = pneg %p61
      $region22: #{gpt_pallas.17} parent=19 // pred_check_branch
        %178 = sbr.rel (%p176) target = $region24
      $region23: #{gpt_pallas.17} parent=19 // pred_region
        %s179 = smul.u32 %s16, 4
        %s180 = sadd.s32 %s179, %s19
        %p181 = scmp.lt.s32.totalorder %s180, 7
        %s182 = scalar_select %p181, %s180, 7
        %p183 = scmp.lt.s32.totalorder %s17, 0
        %s184 = scalar_select %p183, %s17, 0
        %s185 = sadd.s32 %s184, %s182
        %s186 = smul.addr %s185, 4
        %s187 = scalar_lea.vmem %s0, %s186
        %s188 = smul.u32 %s16, 4
        %s189 = sadd.s32 %s188, %s19
      $region24: #{gpt_pallas.17} parent=19 // pred_fallthru
        _
      // Predicated region
      $region25: #{gpt_pallas.17} parent=19 // pred_check
        %p190 = pneg %p89
      $region26: #{gpt_pallas.17} parent=19 // pred_check_branch
        %192 = sbr.rel (%p190) target = $region28
      $region27: #{gpt_pallas.17} parent=19 // pred_region
        %p193 = scmp.lt.s32.totalorder %s19, 3
        %s194 = scalar_select %p193, %s19, 3
        %p195 = scmp.lt.s32.totalorder %s18, 0
        %s196 = scalar_select %p195, %s18, 0
        %s197 = sadd.s32 %s196, %s194
        %s198 = smul.addr %s197, 4
        %s199 = scalar_lea.vmem %s1, %s198
      $region28: #{gpt_pallas.17} parent=19 // pred_fallthru
        _
    $region20: #{gpt_pallas.17} parent=5 // pred_fallthru
      _
    %p200 = scmp.le.s32.totalorder 1, %s9
    %p201 = scmp.lt.s32.totalorder %s9, 9
    %p202 = pnand %p200, %p201
    %p203 = pneg %p202
    // Predicated region
    $region29: #{gpt_pallas.17} parent=5 // pred_check
      _
    $region30: #{gpt_pallas.17} parent=5 // pred_check_branch
      %205 = sbr.rel (%p202) target = $region32
    $region31: #{gpt_pallas.17} parent=5 // pred_region
      %s206 = ssub.s32 %s9, 1
      %s207 = smul.u32 %s20, 4
      %s208 = sadd.s32 %s207, %s23
      %p209 = scmp.lt.s32.totalorder %s208, 7
      %s210 = scalar_select %p209, %s208, 7
      %p211 = scmp.lt.s32.totalorder %s21, 0
      %s212 = scalar_select %p211, %s21, 0
      %s213 = sadd.s32 %s212, %s210
      %s214 = smul.addr %s213, 4
      %s215 = scalar_lea.vmem %s0, %s214
      %p216 = pneg %p67
      %p217 = pneg %p64
      %p218 = scmp.lt.s32.totalorder %s23, 3
      %s219 = scalar_select %p218, %s23, 3
      %p220 = scmp.lt.s32.totalorder %s22, 0
      %s221 = scalar_select %p220, %s22, 0
      %s222 = sadd.s32 %s221, %s219
      %s223 = smul.addr %s222, 4
      %s224 = scalar_lea.vmem %s1, %s223
      %p225 = pneg %p95
      %p226 = pneg %p92
      %p227 = scmp.lt.s32.totalorder %s22, 0
      %s228 = scalar_select %p227, %s22, 0
      %s229 = scalar_lea.vmem %s2, %s228
      %p230 = pneg %p121
      %p231 = pneg %p118
      %p232 = pneg %p151
      %p233 = pneg %p148
      %s234 = sadd.s32 %s20, %s21
      %p235 = scmp.lt.s32.totalorder %s234, 1
      %s236 = scalar_select %p235, %s234, 1
      %p237 = scmp.lt.s32.totalorder %s22, 0
      %s238 = scalar_select %p237, %s22, 0
      %s239 = sadd.s32 %s238, %s236
      %s240 = smul.addr %s239, 4
      %s241 = scalar_lea.vmem %s3, %s240
      %s242 = smul.u32 %s20, 4
      %s243 = sadd.s32 %s242, %s23
      %p244 = scmp.lt.s32.totalorder %s243, 7
      %s245 = scalar_select %p244, %s243, 7
      %p246 = scmp.lt.s32.totalorder %s21, 0
      %s247 = scalar_select %p246, %s21, 0
      %s248 = sadd.s32 %s247, %s245
      %s249 = smul.addr %s248, 4
      %s250 = scalar_lea.vmem %s0, %s249
      %s251 = smul.u32 %s20, 4
      %s252 = sadd.s32 %s251, %s23
      %p253 = scmp.lt.s32.totalorder %s23, 3
      %s254 = scalar_select %p253, %s23, 3
      %p255 = scmp.lt.s32.totalorder %s22, 0
      %s256 = scalar_select %p255, %s22, 0
      %s257 = sadd.s32 %s256, %s254
      %s258 = smul.addr %s257, 4
      %s259 = scalar_lea.vmem %s1, %s258
      %p260 = scmp.lt.s32.totalorder %s22, 0
      %s261 = scalar_select %p260, %s22, 0
      %s262 = scalar_lea.vmem %s2, %s261
      %s263 = sadd.s32 %s20, %s21
      %p264 = scmp.lt.s32.totalorder %s263, 1
      %s265 = scalar_select %p264, %s263, 1
      %p266 = scmp.lt.s32.totalorder %s22, 0
      %s267 = scalar_select %p266, %s22, 0
      %s268 = sadd.s32 %s267, %s265
      %s269 = smul.addr %s268, 4
      %s270 = scalar_lea.vmem %s3, %s269
      %s271 = sadd.s32 %s20, %s21
      %p273 = scmp.eq.s32.totalorder %s23, 0
      // Predicated region
      $region33: #{gpt_pallas.17} parent=31 // pred_check
        %p274 = pneg %p273
      $region34: #{gpt_pallas.17} parent=31 // pred_check_branch
        %276 = sbr.rel (%p274) target = $region36
      $region35: #{gpt_pallas.17} parent=31 // pred_region
        %vm277 = vcmask 261120
        %278 = vst.msk [vmem:[#allocation2] sm:$0xff] %vm277, 0.0
      $region36: #{gpt_pallas.17} parent=31 // pred_fallthru
        _
      %v279 = vld [vmem:[#allocation2] sm:$0xff]
      %v280 = vld [vmem:[%s250] sm:$0xf]
      %v281 = vld [vmem:[%s259] sm:$0xf]
      %vm282 = vcmask 64512
      %v284 = vsel %vm282, %v280, 0
      %vm286 = vcmask 1043456
      %v288 = vsel %vm286, %v281, 0
      %290 = vmatprep.subr.bf16.mxu0 0
      %291 = vmatpush1.bf16.msra.mxu0 0
      %292 = vmatprep.subr.bf16.mxu0 0
      %293 = vmatpush1.bf16.msra.mxu0 0
      %294 = vmatprep.subr.bf16.mxu0 0
      %295 = vmatpush1.bf16.msra.mxu0 0
      %296 = vmatprep.subr.bf16.mxu0 0
      %297 = vmatpush1.bf16.msra.mxu0 0
      %298 = vmatprep.subr.bf16.mxu0 0
      %299 = vmatpush1.bf16.msra.mxu0 0
      %300 = vmatprep.subr.bf16.mxu0 0
      %301 = vmatpush1.bf16.msra.mxu0 0
      %302 = vmatprep.subr.bf16.mxu0 0
      %303 = vmatpush1.bf16.msra.mxu0 0
      %304 = vmatprep.subr.bf16.mxu0 0
      %305 = vmatpush1.bf16.msra.mxu0 %v288
      %306 = vmatprep.subr.bf16.mxu0 0
      %307 = vmatpush2.bf16.msra.mxu0 0
      %308 = vmatprep.subr.bf16.mxu0 0
      %309 = vmatpush2.bf16.msra.mxu0 0
      %310 = vmatprep.subr.bf16.mxu0 0
      %311 = vmatpush2.bf16.msra.mxu0 0
      %312 = vmatprep.subr.bf16.mxu0 0
      %313 = vmatpush2.bf16.msra.mxu0 0
      %314 = vmatprep.subr.bf16.mxu0 0
      %315 = vmatpush2.bf16.msra.mxu0 0
      %316 = vmatprep.subr.bf16.mxu0 0
      %317 = vmatpush2.bf16.msra.mxu0 0
      %318 = vmatprep.subr.bf16.mxu0 0
      %319 = vmatpush2.bf16.msra.mxu0 0
      %320 = vmatprep.subr.bf16.mxu0 0
      %321 = vmatpush2.bf16.msra.mxu0 0
      %322 = vmatprep.mubr.bf16.mxu0 0
      %323 = vmatmul.mubr.bf16.gmra.mxu0 %v284
      %v324 = vpop.f32.mrf.mxu0
      %v325 = vadd.f32 0.0, %v324
      %v326 = vpop.f32.mrf.mxu0
      %v327 = vpop.f32.mrf.mxu0
      %v328 = vpop.f32.mrf.mxu0
      %329 = vdwg.mxu0
      %v330 = vadd.f32 %v279, %v325
      %vm331 = vcmask 261120
      %332 = vst.msk [vmem:[#allocation2] sm:$0xff] %vm331, %v330
      %p333 = scmp.eq.s32.totalorder %s23, 3
      // Predicated region
      $region37: #{gpt_pallas.17} parent=31 // pred_check
        %p334 = pneg %p333
      $region38: #{gpt_pallas.17} parent=31 // pred_check_branch
        %336 = sbr.rel (%p334) target = $region40
      $region39: #{gpt_pallas.17} parent=31 // pred_region
        %v337 = vld [vmem:[#allocation2] sm:$0xff]
        %v338 = vld [vmem:[%s262] sm:$0x1]
        %v339 = vunpack.c.l.bf16 %v338
        %v340 = vlaneseq
        %v341 = vshrl.u32 %v340, 7
        %v342 = vsub.s32 0, %v341
        %v343 = vrot.slane %v339, %v342
        %v344 = vadd.f32 %v337, %v343
        %v345 = vpack.c.bf16 %v344, %v344
        %vm346 = vcmask 257024
        %347 = vst.msk [vmem:[%s270] sm:$0xf] %vm346, %v345
      $region40: #{gpt_pallas.17} parent=31 // pred_fallthru
        _
      %s348 = sadd.s32 %s20, %s21
      %p349 = scmp.lt.s32.totalorder %s348, 1
      %s350 = scalar_select %p349, %s348, 1
      %p351 = scmp.lt.s32.totalorder %s22, 0
      %s352 = scalar_select %p351, %s22, 0
      %s353 = sadd.s32 %s352, %s350
      %s354 = smul.addr %s353, 4
      %s355 = scalar_lea.vmem %s3, %s354
      // Predicated region
      $region41: #{gpt_pallas.17} parent=31 // pred_check
        %p356 = pneg %p148
      $region42: #{gpt_pallas.17} parent=31 // pred_check_branch
        %358 = sbr.rel (%p356) target = $region44
      $region43: #{gpt_pallas.17} parent=31 // pred_region
        %s359 = sadd.s32 %s20, %s21
      $region44: #{gpt_pallas.17} parent=31 // pred_fallthru
        _
    $region32: #{gpt_pallas.17} parent=5 // pred_fallthru
      _
    %p360 = scmp.le.s32.totalorder 2, %s9
    // Predicated region
    $region45: #{gpt_pallas.17} parent=5 // pred_check
      %p361 = pneg %p360
    $region46: #{gpt_pallas.17} parent=5 // pred_check_branch
      %363 = sbr.rel (%p361) target = $region48
    $region47: #{gpt_pallas.17} parent=5 // pred_region
      %s364 = ssub.s32 %s9, 2
      // Predicated region
      $region49: #{gpt_pallas.17} parent=47 // pred_check
        %p365 = pneg %p154
      $region50: #{gpt_pallas.17} parent=47 // pred_check_branch
        %367 = sbr.rel (%p365) target = $region52
      $region51: #{gpt_pallas.17} parent=47 // pred_region
        %s368 = sadd.s32 %s24, %s25
        %p369 = scmp.lt.s32.totalorder %s368, 1
        %s370 = scalar_select %p369, %s368, 1
        %p371 = scmp.lt.s32.totalorder %s26, 0
        %s372 = scalar_select %p371, %s26, 0
        %s373 = sadd.s32 %s372, %s370
        %s374 = smul.addr %s373, 4
        %s375 = scalar_lea.vmem %s3, %s374
      $region52: #{gpt_pallas.17} parent=47 // pred_fallthru
        _
    $region48: #{gpt_pallas.17} parent=5 // pred_fallthru
      _
  $region6: #{gpt_pallas.17} parent=0 // loop_footer
    %s13 = sadd.s32 1, %s9
  $region7: #{gpt_pallas.17} parent=0 // loop_footer_branch
    %8 = sbr.rel target = $region3
  $region8: #{gpt_pallas.17} parent=0 // loop_exit
    _

// kernel: gpt_pallas.16
$region0: #{gpt_pallas.16}
  #allocation0 [shape = 'u32[]', space=smem, size = 0x4, offset = 0x4, fixed_abs, tag = 'smem constant byte address 0x4 - core index']
  #allocation1 [shape = 'u32[144,128]{1,0:T(1,128)}', space=vmem, size = 0x12000, scoped, tag = 'internal scratch']
  #allocation2 [shape = 'f32[8,1]{1,0:T(8,128)}', space=vmem, size = 0x1000, scoped, tag = 'scratch operand']
  #allocation3 [shape = 'f32[8,1]{1,0:T(8,128)}', space=vmem, size = 0x1000, scoped, tag = 'scratch operand']
  #allocation4 [shape = 'f32[8,8]{1,0:T(8,128)}', space=vmem, size = 0x1000, scoped, tag = 'scratch operand']
  %s0 = inlined_call_operand.vmem [shape: bf16[8,8,8], index: 0, kind: input, shape index: {}]
  %s1 = inlined_call_operand.vmem [shape: bf16[8,8,8], index: 1, kind: input, shape index: {}]
  %s2 = inlined_call_operand.vmem [shape: bf16[8,8,8], index: 2, kind: input, shape index: {}]
  %s3 = inlined_call_operand.vmem [shape: bf16[8,8,8], index: 3, kind: output, shape index: {}]
  %s4 = sld [smem:[#allocation0]]
  $region57: #{gpt_pallas.16} parent=0
    _
  %s6 = ssub.s32 1, %s4
  %s7 = scalar_select 0, %s6, %s4
  loop: start=0, step=1, limit=10
  $region2: #{gpt_pallas.16} parent=0 // loop_pre_header
    _
  $region3: #{gpt_pallas.16} parent=0 // loop_header
    %s9 = sphi 0, %s13
    %p10 = scmp.ge.s32.totalorder %s9, 10
    %s16 = sphi 0, %s35
    %s17 = sphi 0, %s31
    %s18 = sphi 0, %s27
    %s19 = sphi 0, %s16
    %s20 = sphi 0, %s17
    %s21 = sphi 0, %s18
    %s22 = sphi 0, %s19
    %s23 = sphi 0, %s20
    %s24 = sphi 0, %s21
    %s40 = sphi 0, %s42
    %s43 = sphi 0, %s40
    %s44 = sphi 0, %s43
    %s60 = sphi 0, %s44
    %s68 = sphi 0, %s70
    %s71 = sphi 0, %s68
    %s72 = sphi 0, %s71
    %s88 = sphi 0, %s72
    %s96 = sphi 0, %s98
    %s99 = sphi 0, %s96
    %s100 = sphi 0, %s99
    %s116 = sphi 0, %s100
    %s124 = sphi 0, %s126
    %s127 = sphi 0, %s124
    %s128 = sphi 0, %s127
    %s144 = sphi 0, %s128
  $region4: #{gpt_pallas.16} parent=0 // loop_header_branch
    %12 = sbr.rel (%p10) target = $region8
  $region5: #{gpt_pallas.16} parent=0 // loop_body
    %s14 = ssub.s32 %s9, 1
    %s15 = ssub.s32 %s9, 2
    %s25 = sadd.s32 1, %s18
    %p26 = scmp.ge.s32.totalorder %s25, 1
    %s27 = scalar_select %p26, 0, %s25
    %s28 = sadd.s32 1, %s17
    %s29 = scalar_select %p26, %s28, %s17
    %p30 = scmp.ge.s32.totalorder %s29, 1
    %s31 = scalar_select %p30, 0, %s29
    %s32 = sadd.s32 1, %s16
    %s33 = scalar_select %p30, %s32, %s16
    %p34 = scmp.ge.s32.totalorder %s33, 8
    %s35 = scalar_select %p34, 0, %s33
    %s36 = ssub.s32 %s16, %s35
    %s37 = ssub.s32 %s17, %s31
    %s38 = sor.u32 %s36, %s37
    %p39 = scmp.eq.s32.totalorder %s38, 0
    %s41 = sadd.s32 %s40, 1
    %s42 = scalar_select %p39, %s40, %s41
    %p45 = pneg %p39
    %p46 = scmp.eq.s32.totalorder %s9, 7
    %p47 = por %p45, %p46
    %p48 = scmp.ne.s32.totalorder %s40, %s43
    %p49 = scmp.eq.s32.totalorder %s9, 0
    %p50 = por %p48, %p49
    %p51 = scmp.ne.s32.totalorder %s40, %s43
    %p52 = scmp.eq.s32.totalorder %s14, 7
    %p53 = por %p51, %p52
    %p54 = scmp.ne.s32.totalorder %s43, %s44
    %p55 = scmp.eq.s32.totalorder %s14, 0
    %p56 = por %p54, %p55
    %p57 = scmp.ne.s32.totalorder %s43, %s44
    %p58 = scmp.eq.s32.totalorder %s15, 7
    %p59 = por %p57, %p58
    %p61 = scmp.ne.s32.totalorder %s44, %s60
    %p62 = scmp.eq.s32.totalorder %s15, 0
    %p63 = por %p61, %p62
    %s64 = ssub.s32 %s16, %s35
    %s65 = ssub.s32 %s18, %s27
    %s66 = sor.u32 %s64, %s65
    %p67 = scmp.eq.s32.totalorder %s66, 0
    %s69 = sadd.s32 %s68, 1
    %s70 = scalar_select %p67, %s68, %s69
    %p73 = pneg %p67
    %p74 = scmp.eq.s32.totalorder %s9, 7
    %p75 = por %p73, %p74
    %p76 = scmp.ne.s32.totalorder %s68, %s71
    %p77 = scmp.eq.s32.totalorder %s9, 0
    %p78 = por %p76, %p77
    %p79 = scmp.ne.s32.totalorder %s68, %s71
    %p80 = scmp.eq.s32.totalorder %s14, 7
    %p81 = por %p79, %p80
    %p82 = scmp.ne.s32.totalorder %s71, %s72
    %p83 = scmp.eq.s32.totalorder %s14, 0
    %p84 = por %p82, %p83
    %p85 = scmp.ne.s32.totalorder %s71, %s72
    %p86 = scmp.eq.s32.totalorder %s15, 7
    %p87 = por %p85, %p86
    %p89 = scmp.ne.s32.totalorder %s72, %s88
    %p90 = scmp.eq.s32.totalorder %s15, 0
    %p91 = por %p89, %p90
    %s92 = ssub.s32 %s16, %s35
    %s93 = ssub.s32 %s18, %s27
    %s94 = sor.u32 %s92, %s93
    %p95 = scmp.eq.s32.totalorder %s94, 0
    %s97 = sadd.s32 %s96, 1
    %s98 = scalar_select %p95, %s96, %s97
    %p101 = pneg %p95
    %p102 = scmp.eq.s32.totalorder %s9, 7
    %p103 = por %p101, %p102
    %p104 = scmp.ne.s32.totalorder %s96, %s99
    %p105 = scmp.eq.s32.totalorder %s9, 0
    %p106 = por %p104, %p105
    %p107 = scmp.ne.s32.totalorder %s96, %s99
    %p108 = scmp.eq.s32.totalorder %s14, 7
    %p109 = por %p107, %p108
    %p110 = scmp.ne.s32.totalorder %s99, %s100
    %p111 = scmp.eq.s32.totalorder %s14, 0
    %p112 = por %p110, %p111
    %p113 = scmp.ne.s32.totalorder %s99, %s100
    %p114 = scmp.eq.s32.totalorder %s15, 7
    %p115 = por %p113, %p114
    %p117 = scmp.ne.s32.totalorder %s100, %s116
    %p118 = scmp.eq.s32.totalorder %s15, 0
    %p119 = por %p117, %p118
    %s120 = ssub.s32 %s16, %s35
    %s121 = ssub.s32 %s17, %s31
    %s122 = sor.u32 %s120, %s121
    %p123 = scmp.eq.s32.totalorder %s122, 0
    %s125 = sadd.s32 %s124, 1
    %s126 = scalar_select %p123, %s124, %s125
    %p129 = pneg %p123
    %p130 = scmp.eq.s32.totalorder %s9, 7
    %p131 = por %p129, %p130
    %p132 = scmp.ne.s32.totalorder %s124, %s127
    %p133 = scmp.eq.s32.totalorder %s9, 0
    %p134 = por %p132, %p133
    %p135 = scmp.ne.s32.totalorder %s124, %s127
    %p136 = scmp.eq.s32.totalorder %s14, 7
    %p137 = por %p135, %p136
    %p138 = scmp.ne.s32.totalorder %s127, %s128
    %p139 = scmp.eq.s32.totalorder %s14, 0
    %p140 = por %p138, %p139
    %p141 = scmp.ne.s32.totalorder %s127, %s128
    %p142 = scmp.eq.s32.totalorder %s15, 7
    %p143 = por %p141, %p142
    %p145 = scmp.ne.s32.totalorder %s128, %s144
    %p146 = scmp.eq.s32.totalorder %s15, 0
    %p147 = por %p145, %p146
    %p148 = scmp.le.s32.totalorder 1, %s9
    %p149 = scmp.lt.s32.totalorder %s9, 9
    %p150 = pnand %p148, %p149
    %p151 = pneg %p150
    // Predicated region
    $region9: #{gpt_pallas.16} parent=5 // pred_check
      _
    $region10: #{gpt_pallas.16} parent=5 // pred_check_branch
      %153 = sbr.rel (%p150) target = $region12
    $region11: #{gpt_pallas.16} parent=5 // pred_region
      %s154 = ssub.s32 %s9, 1
    $region12: #{gpt_pallas.16} parent=5 // pred_fallthru
      _
    %p155 = scmp.lt.s32.totalorder %s9, 8
    // Predicated region
    $region13: #{gpt_pallas.16} parent=5 // pred_check
      %p156 = pneg %p155
    $region14: #{gpt_pallas.16} parent=5 // pred_check_branch
      %158 = sbr.rel (%p156) target = $region16
    $region15: #{gpt_pallas.16} parent=5 // pred_region
      // Predicated region
      $region17: #{gpt_pallas.16} parent=15 // pred_check
        %p159 = pneg %p50
      $region18: #{gpt_pallas.16} parent=15 // pred_check_branch
        %161 = sbr.rel (%p159) target = $region20
      $region19: #{gpt_pallas.16} parent=15 // pred_region
        %p162 = scmp.lt.s32.totalorder %s16, 7
        %s163 = scalar_select %p162, %s16, 7
        %p164 = scmp.lt.s32.totalorder %s17, 0
        %s165 = scalar_select %p164, %s17, 0
        %s166 = sadd.s32 %s165, %s163
        %s167 = smul.addr %s166, 4
        %s168 = scalar_lea.vmem %s0, %s167
      $region20: #{gpt_pallas.16} parent=15 // pred_fallthru
        _
      // Predicated region
      $region21: #{gpt_pallas.16} parent=15 // pred_check
        %p169 = pneg %p78
      $region22: #{gpt_pallas.16} parent=15 // pred_check_branch
        %171 = sbr.rel (%p169) target = $region24
      $region23: #{gpt_pallas.16} parent=15 // pred_region
        %p172 = scmp.lt.s32.totalorder %s16, 7
        %s173 = scalar_select %p172, %s16, 7
        %p174 = scmp.lt.s32.totalorder %s18, 0
        %s175 = scalar_select %p174, %s18, 0
        %s176 = sadd.s32 %s175, %s173
        %s177 = smul.addr %s176, 4
        %s178 = scalar_lea.vmem %s1, %s177
      $region24: #{gpt_pallas.16} parent=15 // pred_fallthru
        _
      // Predicated region
      $region25: #{gpt_pallas.16} parent=15 // pred_check
        %p179 = pneg %p106
      $region26: #{gpt_pallas.16} parent=15 // pred_check_branch
        %181 = sbr.rel (%p179) target = $region28
      $region27: #{gpt_pallas.16} parent=15 // pred_region
        %p182 = scmp.lt.s32.totalorder %s16, 7
        %s183 = scalar_select %p182, %s16, 7
        %p184 = scmp.lt.s32.totalorder %s18, 0
        %s185 = scalar_select %p184, %s18, 0
        %s186 = sadd.s32 %s185, %s183
        %s187 = smul.addr %s186, 4
        %s188 = scalar_lea.vmem %s2, %s187
      $region28: #{gpt_pallas.16} parent=15 // pred_fallthru
        _
    $region16: #{gpt_pallas.16} parent=5 // pred_fallthru
      _
    %p189 = scmp.le.s32.totalorder 1, %s9
    %p190 = scmp.lt.s32.totalorder %s9, 9
    %p191 = pnand %p189, %p190
    %p192 = pneg %p191
    // Predicated region
    $region29: #{gpt_pallas.16} parent=5 // pred_check
      _
    $region30: #{gpt_pallas.16} parent=5 // pred_check_branch
      %194 = sbr.rel (%p191) target = $region32
    $region31: #{gpt_pallas.16} parent=5 // pred_region
      %s195 = ssub.s32 %s9, 1
      %p196 = scmp.lt.s32.totalorder %s19, 7
      %s197 = scalar_select %p196, %s19, 7
      %p198 = scmp.lt.s32.totalorder %s20, 0
      %s199 = scalar_select %p198, %s20, 0
      %s200 = sadd.s32 %s199, %s197
      %s201 = smul.addr %s200, 4
      %s202 = scalar_lea.vmem %s0, %s201
      %p203 = pneg %p56
      %p204 = pneg %p53
      %p205 = scmp.lt.s32.totalorder %s19, 7
      %s206 = scalar_select %p205, %s19, 7
      %p207 = scmp.lt.s32.totalorder %s21, 0
      %s208 = scalar_select %p207, %s21, 0
      %s209 = sadd.s32 %s208, %s206
      %s210 = smul.addr %s209, 4
      %s211 = scalar_lea.vmem %s1, %s210
      %p212 = pneg %p84
      %p213 = pneg %p81
      %p214 = scmp.lt.s32.totalorder %s19, 7
      %s215 = scalar_select %p214, %s19, 7
      %p216 = scmp.lt.s32.totalorder %s21, 0
      %s217 = scalar_select %p216, %s21, 0
      %s218 = sadd.s32 %s217, %s215
      %s219 = smul.addr %s218, 4
      %s220 = scalar_lea.vmem %s2, %s219
      %p221 = pneg %p112
      %p222 = pneg %p109
      %p223 = pneg %p140
      %p224 = pneg %p137
      %p225 = scmp.lt.s32.totalorder %s19, 7
      %s226 = scalar_select %p225, %s19, 7
      %p227 = scmp.lt.s32.totalorder %s20, 0
      %s228 = scalar_select %p227, %s20, 0
      %s229 = sadd.s32 %s228, %s226
      %s230 = smul.addr %s229, 4
      %s231 = scalar_lea.vmem %s3, %s230
      %p232 = scmp.lt.s32.totalorder %s19, 7
      %s233 = scalar_select %p232, %s19, 7
      %p234 = scmp.lt.s32.totalorder %s20, 0
      %s235 = scalar_select %p234, %s20, 0
      %s236 = sadd.s32 %s235, %s233
      %s237 = smul.addr %s236, 4
      %s238 = scalar_lea.vmem %s0, %s237
      %p239 = scmp.lt.s32.totalorder %s19, 7
      %s240 = scalar_select %p239, %s19, 7
      %p241 = scmp.lt.s32.totalorder %s21, 0
      %s242 = scalar_select %p241, %s21, 0
      %s243 = sadd.s32 %s242, %s240
      %s244 = smul.addr %s243, 4
      %s245 = scalar_lea.vmem %s1, %s244
      %p246 = scmp.lt.s32.totalorder %s19, 7
      %s247 = scalar_select %p246, %s19, 7
      %p248 = scmp.lt.s32.totalorder %s21, 0
      %s249 = scalar_select %p248, %s21, 0
      %s250 = sadd.s32 %s249, %s247
      %s251 = smul.addr %s250, 4
      %s252 = scalar_lea.vmem %s2, %s251
      %p253 = scmp.lt.s32.totalorder %s19, 7
      %s254 = scalar_select %p253, %s19, 7
      %p255 = scmp.lt.s32.totalorder %s20, 0
      %s256 = scalar_select %p255, %s20, 0
      %s257 = sadd.s32 %s256, %s254
      %s258 = smul.addr %s257, 4
      %s259 = scalar_lea.vmem %s3, %s258
      %p262 = scmp.eq.s32.totalorder %s21, 0
      // Predicated region
      $region33: #{gpt_pallas.16} parent=31 // pred_check
        %p263 = pneg %p262
      $region34: #{gpt_pallas.16} parent=31 // pred_check_branch
        %265 = sbr.rel (%p263) target = $region36
      $region35: #{gpt_pallas.16} parent=31 // pred_region
        %vm266 = vcmask 7168
        %267 = vst.msk [vmem:[#allocation2] sm:$0xff] %vm266, -inf
        %268 = vst.msk [vmem:[#allocation3] sm:$0xff] %vm266, 0.0
        %vm269 = vcmask 64512
        %270 = vst.msk [vmem:[#allocation4] sm:$0xff] %vm269, 0.0
      $region36: #{gpt_pallas.16} parent=31 // pred_fallthru
        _
      %s271 = smul.u32 %s21, 8
      %s272 = smul.u32 %s20, 8
      %s273 = sadd.s32 %s272, 7
      %p274 = scmp.le.s32.totalorder %s271, %s273
      // Predicated region
      $region37: #{gpt_pallas.16} parent=31 // pred_check
        %p275 = pneg %p274
      $region38: #{gpt_pallas.16} parent=31 // pred_check_branch
        %277 = sbr.rel (%p275) target = $region40
      $region39: #{gpt_pallas.16} parent=31 // pred_region
        %v278 = vld [vmem:[%s238] sm:$0xf]
        %v279 = vmul.bf16 %v278, 1052065461
        %v280 = vld [vmem:[%s245] sm:$0xf]
        %vm281 = vcmask 64512
        %v283 = vsel %vm281, %v279, 0
        %v286 = vsel %vm281, %v280, 0
        %288 = vmatprep.subr.bf16.mxu0 0
        %289 = vmatpush1.bf16.xpose.msra.mxu0 0
        %290 = vmatprep.subr.bf16.mxu0 0
        %291 = vmatpush1.bf16.xpose.msra.mxu0 0
        %292 = vmatprep.subr.bf16.mxu0 0
        %293 = vmatpush1.bf16.xpose.msra.mxu0 0
        %294 = vmatprep.subr.bf16.mxu0 0
        %295 = vmatpush1.bf16.xpose.msra.mxu0 0
        %296 = vmatprep.subr.bf16.mxu0 0
        %297 = vmatpush1.bf16.xpose.msra.mxu0 0
        %298 = vmatprep.subr.bf16.mxu0 0
        %299 = vmatpush1.bf16.xpose.msra.mxu0 0
        %300 = vmatprep.subr.bf16.mxu0 0
        %301 = vmatpush1.bf16.xpose.msra.mxu0 0
        %302 = vmatprep.subr.bf16.mxu0 0
        %303 = vmatpush1.bf16.xpose.msra.mxu0 %v286
        %304 = vmatprep.subr.bf16.mxu0 0
        %305 = vmatpush2.bf16.xpose.msra.mxu0 0
        %306 = vmatprep.subr.bf16.mxu0 0
        %307 = vmatpush2.bf16.xpose.msra.mxu0 0
        %308 = vmatprep.subr.bf16.mxu0 0
        %309 = vmatpush2.bf16.xpose.msra.mxu0 0
        %310 = vmatprep.subr.bf16.mxu0 0
        %311 = vmatpush2.bf16.xpose.msra.mxu0 0
        %312 = vmatprep.subr.bf16.mxu0 0
        %313 = vmatpush2.bf16.xpose.msra.mxu0 0
        %314 = vmatprep.subr.bf16.mxu0 0
        %315 = vmatpush2.bf16.xpose.msra.mxu0 0
        %316 = vmatprep.subr.bf16.mxu0 0
        %317 = vmatpush2.bf16.xpose.msra.mxu0 0
        %318 = vmatprep.subr.bf16.mxu0 0
        %319 = vmatpush2.bf16.xpose.msra.mxu0 0
        %320 = vmatprep.mubr.bf16.mxu0 0
        %321 = vmatmul.mubr.bf16.gmra.mxu0 %v283
        %v322 = vpop.f32.mrf.mxu0
        %v323 = vadd.f32 0.0, %v322
        %v324 = vpop.f32.mrf.mxu0
        %v325 = vpop.f32.mrf.mxu0
        %v326 = vpop.f32.mrf.mxu0
        %327 = vdwg.mxu0
        %v328 = vlaneseq
        %v329 = vshrl.u32 %v328, 7
        %v330 = vstv %s272
        %v331 = vadd.s32 %v330, %v329
        %v332 = vlaneseq
        %v333 = vand.u32 %v332, 127
        %v334 = vstv %s271
        %v335 = vadd.s32 %v334, %v333
        %vm336 = vcmp.le.s32.totalorder %v335, %v331
        %v337 = vsel %vm336, %v323, -1e+30
        %v338 = vld [vmem:[#allocation2] sm:$0xff]
        %v339 = vsel %vm281, %v337, -inf
        %340 = vmax.xlane.f32.xlu0 %v339
        %v341 = vpop.xlane.xlu0 %340
        %v342 = vmax.f32 %v338, %v341
        %v343 = vsub.f32 %v338, %v342
        %v344 = vmul.f32 %v343, 1.442695
        %v345 = vpow.pop %v344
        %347 = vset.pattern.permute.xlu0 0
        %348 = vperm.xlu0 %347, %v342
        %v349 = vpop.permute.xlu0 %348
        %v351 = vsub.f32 %v337, %v349
        %v352 = vmul.f32 %v351, 1.442695
        %v353 = vpow.pop %v352
        %v354 = vld [vmem:[#allocation3] sm:$0xff]
        %v355 = vmul.f32 %v345, %v354
        %v356 = vsel %vm281, %v353, 0.0
        %357 = vadd.xlane.f32.xlu0 %v356
        %v358 = vpop.xlane.xlu0 %357
        %v359 = vadd.f32 %v355, %v358
        %vm360 = vcmask 7168
        %361 = vst.msk [vmem:[#allocation3] sm:$0xff] %vm360, %v359
        %v362 = vld [vmem:[#allocation4] sm:$0xff]
        %364 = vset.pattern.permute.xlu0 0
        %365 = vperm.xlu0 %364, %v345
        %v366 = vpop.permute.xlu0 %365
        %v368 = vmul.f32 %v366, %v362
        %v369 = vpack.c.bf16 %v353, %v353
        %v370 = vld [vmem:[%s252] sm:$0xf]
        %v372 = vsel %vm281, %v369, 0
        %vm374 = vcmask 1043456
        %v376 = vsel %vm374, %v370, 0
        %378 = vmatprep.subr.bf16.mxu0 0
        %379 = vmatpush1.bf16.msra.mxu0 0
        %380 = vmatprep.subr.bf16.mxu0 0
        %381 = vmatpush1.bf16.msra.mxu0 0
        %382 = vmatprep.subr.bf16.mxu0 0
        %383 = vmatpush1.bf16.msra.mxu0 0
        %384 = vmatprep.subr.bf16.mxu0 0
        %385 = vmatpush1.bf16.msra.mxu0 0
        %386 = vmatprep.subr.bf16.mxu0 0
        %387 = vmatpush1.bf16.msra.mxu0 0
        %388 = vmatprep.subr.bf16.mxu0 0
        %389 = vmatpush1.bf16.msra.mxu0 0
        %390 = vmatprep.subr.bf16.mxu0 0
        %391 = vmatpush1.bf16.msra.mxu0 0
        %392 = vmatprep.subr.bf16.mxu0 0
        %393 = vmatpush1.bf16.msra.mxu0 %v376
        %394 = vmatprep.subr.bf16.mxu0 0
        %395 = vmatpush2.bf16.msra.mxu0 0
        %396 = vmatprep.subr.bf16.mxu0 0
        %397 = vmatpush2.bf16.msra.mxu0 0
        %398 = vmatprep.subr.bf16.mxu0 0
        %399 = vmatpush2.bf16.msra.mxu0 0
        %400 = vmatprep.subr.bf16.mxu0 0
        %401 = vmatpush2.bf16.msra.mxu0 0
        %402 = vmatprep.subr.bf16.mxu0 0
        %403 = vmatpush2.bf16.msra.mxu0 0
        %404 = vmatprep.subr.bf16.mxu0 0
        %405 = vmatpush2.bf16.msra.mxu0 0
        %406 = vmatprep.subr.bf16.mxu0 0
        %407 = vmatpush2.bf16.msra.mxu0 0
        %408 = vmatprep.subr.bf16.mxu0 0
        %409 = vmatpush2.bf16.msra.mxu0 0
        %410 = vmatprep.mubr.bf16.mxu0 0
        %411 = vmatmul.mubr.bf16.gmra.mxu0 %v372
        %v412 = vpop.f32.mrf.mxu0
        %v413 = vadd.f32 0.0, %v412
        %v414 = vpop.f32.mrf.mxu0
        %v415 = vpop.f32.mrf.mxu0
        %v416 = vpop.f32.mrf.mxu0
        %417 = vdwg.mxu0
        %v418 = vadd.f32 %v368, %v413
        %419 = vst.msk [vmem:[#allocation4] sm:$0xff] %vm281, %v418
        %420 = vst.msk [vmem:[#allocation2] sm:$0xff] %vm360, %v342
      $region40: #{gpt_pallas.16} parent=31 // pred_fallthru
        _
      // Predicated region
      $region41: #{gpt_pallas.16} parent=31 // pred_check
        %p421 = pneg %p262
      $region42: #{gpt_pallas.16} parent=31 // pred_check_branch
        %423 = sbr.rel (%p421) target = $region44
      $region43: #{gpt_pallas.16} parent=31 // pred_region
        %v424 = vld [vmem:[#allocation4] sm:$0xff]
        %v425 = vld [vmem:[#allocation3] sm:$0xff]
        %v426 = vrcp.pop %v425
        %428 = vset.pattern.permute.xlu0 0
        %429 = vperm.xlu0 %428, %v426
        %v430 = vpop.permute.xlu0 %429
        %v432 = vmul.f32 %v424, %v430
        %v433 = vpack.c.bf16 %v432, %v432
        %vm434 = vcmask 60416
        %435 = vst.msk [vmem:[%s259] sm:$0xf] %vm434, %v433
      $region44: #{gpt_pallas.16} parent=31 // pred_fallthru
        _
      %p436 = scmp.lt.s32.totalorder %s19, 7
      %s437 = scalar_select %p436, %s19, 7
      %p438 = scmp.lt.s32.totalorder %s20, 0
      %s439 = scalar_select %p438, %s20, 0
      %s440 = sadd.s32 %s439, %s437
      %s441 = smul.addr %s440, 4
      %s442 = scalar_lea.vmem %s3, %s441
      // Predicated region
      $region45: #{gpt_pallas.16} parent=31 // pred_check
        %p443 = pneg %p137
      $region46: #{gpt_pallas.16} parent=31 // pred_check_branch
        %445 = sbr.rel (%p443) target = $region48
      $region47: #{gpt_pallas.16} parent=31 // pred_region
        _
      $region48: #{gpt_pallas.16} parent=31 // pred_fallthru
        _
    $region32: #{gpt_pallas.16} parent=5 // pred_fallthru
      _
    %p446 = scmp.le.s32.totalorder 2, %s9
    // Predicated region
    $region49: #{gpt_pallas.16} parent=5 // pred_check
      %p447 = pneg %p446
    $region50: #{gpt_pallas.16} parent=5 // pred_check_branch
      %449 = sbr.rel (%p447) target = $region52
    $region51: #{gpt_pallas.16} parent=5 // pred_region
      %s450 = ssub.s32 %s9, 2
      // Predicated region
      $region53: #{gpt_pallas.16} parent=51 // pred_check
        %p451 = pneg %p143
      $region54: #{gpt_pallas.16} parent=51 // pred_check_branch
        %453 = sbr.rel (%p451) target = $region56
      $region55: #{gpt_pallas.16} parent=51 // pred_region
        %p454 = scmp.lt.s32.totalorder %s22, 7
        %s455 = scalar_select %p454, %s22, 7
        %p456 = scmp.lt.s32.totalorder %s23, 0
        %s457 = scalar_select %p456, %s23, 0
        %s458 = sadd.s32 %s457, %s455
        %s459 = smul.addr %s458, 4
        %s460 = scalar_lea.vmem %s3, %s459
      $region56: #{gpt_pallas.16} parent=51 // pred_fallthru
        _
    $region52: #{gpt_pallas.16} parent=5 // pred_fallthru
      _
  $region6: #{gpt_pallas.16} parent=0 // loop_footer
    %s13 = sadd.s32 1, %s9
  $region7: #{gpt_pallas.16} parent=0 // loop_footer_branch
    %8 = sbr.rel target = $region3
  $region8: #{gpt_pallas.16} parent=0 // loop_exit
    _

// kernel: gpt_pallas.26
$region0: #{gpt_pallas.26}
  #allocation0 [shape = 'u32[]', space=smem, size = 0x4, offset = 0x4, fixed_abs, tag = 'smem constant byte address 0x4 - core index']
  #allocation1 [shape = 'u32[144,128]{1,0:T(1,128)}', space=vmem, size = 0x12000, scoped, tag = 'internal scratch']
  %s0 = inlined_call_operand.vmem [shape: bf16[16,32], index: 0, kind: input, shape index: {}]
  %s1 = inlined_call_operand.vmem [shape: bf16[16,32], index: 1, kind: input, shape index: {}]
  %s2 = inlined_call_operand.vmem [shape: bf16[1,32], index: 2, kind: input, shape index: {}]
  %s3 = inlined_call_operand.vmem [shape: bf16[1,32], index: 3, kind: input, shape index: {}]
  %s4 = inlined_call_operand.hbm [shape: bf16[16,32], index: 4, kind: output, shape index: {0}]
  %s5 = inlined_call_operand.vmem [shape: bf16[16,32], index: 5, kind: output, shape index: {1}]
  %6 = xla_tuple %s4, %s5
  %s7 = sld [smem:[#allocation0]]
  $region34: #{gpt_pallas.26} parent=0
    _
  %s9 = ssub.s32 1, %s7
  %s10 = scalar_select 0, %s9, %s7
  $region1: #{gpt_pallas.26} parent=0
    #allocation2 [shape = 'u8[4096]{0}', space=vmem, size = 0x1000, scoped, tag = 'output window, operand 0, single buffered']
    #allocation3 [shape = 's32[1]{0}', space=sflag, size = 0x4, scoped, tag = 'scoped memory for gpt_pallas.26']
    %11 = vsyncpa [#allocation3], 0
    // Predicated region
    $region2: #{gpt_pallas.26} parent=1 // pred_check
      _
    $region3: #{gpt_pallas.26} parent=1 // pred_check_branch
      %13 = sbr.rel (0) target = $region5
    $region4: #{gpt_pallas.26} parent=1 // pred_region
      _
    $region5: #{gpt_pallas.26} parent=1 // pred_fallthru
      _
    // Predicated region
    $region6: #{gpt_pallas.26} parent=1 // pred_check
      _
    $region7: #{gpt_pallas.26} parent=1 // pred_check_branch
      %15 = sbr.rel (0) target = $region9
    $region8: #{gpt_pallas.26} parent=1 // pred_region
      _
    $region9: #{gpt_pallas.26} parent=1 // pred_fallthru
      _
    // Predicated region
    $region10: #{gpt_pallas.26} parent=1 // pred_check
      _
    $region11: #{gpt_pallas.26} parent=1 // pred_check_branch
      %17 = sbr.rel (0) target = $region13
    $region12: #{gpt_pallas.26} parent=1 // pred_region
      _
    $region13: #{gpt_pallas.26} parent=1 // pred_fallthru
      _
    // Predicated region
    $region14: #{gpt_pallas.26} parent=1 // pred_check
      _
    $region15: #{gpt_pallas.26} parent=1 // pred_check_branch
      %19 = sbr.rel (0) target = $region17
    $region16: #{gpt_pallas.26} parent=1 // pred_region
      _
    $region17: #{gpt_pallas.26} parent=1 // pred_fallthru
      _
    %v20 = vld [vmem:[%s0] sm:$0xf]
    %v21 = vld [vmem:[%s0 + $0x4] sm:$0xf]
    %v22 = vunpack.c.l.bf16 %v20
    %v23 = vunpack.c.l.bf16 %v21
    %v24 = vld [vmem:[%s1] sm:$0xf]
    %v25 = vld [vmem:[%s1 + $0x4] sm:$0xf]
    %v26 = vunpack.c.l.bf16 %v24
    %v27 = vunpack.c.l.bf16 %v25
    %v28 = vadd.f32 %v22, %v26
    %v29 = vadd.f32 %v23, %v27
    %v30 = vpack.c.bf16 %v29, %v28
    %v32 = vunpack.c.l.b16 %v30
    %v33 = vunpack.c.h.b16 %v30
    %v34 = vpack.c.b16 %v32, %v32
    %v35 = vpack.c.b16 %v33, %v33
    %vm38 = vcmask 257024
    %39 = vst.msk [vmem:[#allocation2] sm:$0xf] %vm38, %v34
    %40 = vst.msk [vmem:[#allocation2 + $0x4] sm:$0xf] %vm38, %v35
    %vm41 = vcmask 261120
    %v42 = vsel %vm41, %v28, 0.0
    %43 = vadd.xlane.f32.xlu0 %v42
    %v44 = vpop.xlane.xlu0 %43
    %v45 = vsel %vm41, %v29, 0.0
    %46 = vadd.xlane.f32.xlu0 %v45
    %v47 = vpop.xlane.xlu0 %46
    %v48 = vrcp.pop 32.0
    %v49 = vmul.f32 %v44, %v48
    %v50 = vmul.f32 %v47, %v48
    %v51 = vsub.f32 %v28, %v49
    %v52 = vsub.f32 %v29, %v50
    %v53 = vmul.f32 %v51, %v51
    %v54 = vmul.f32 %v52, %v52
    %v55 = vsel %vm41, %v53, 0.0
    %56 = vadd.xlane.f32.xlu0 %v55
    %v57 = vpop.xlane.xlu0 %56
    %v58 = vsel %vm41, %v54, 0.0
    %59 = vadd.xlane.f32.xlu0 %v58
    %v60 = vpop.xlane.xlu0 %59
    %v61 = vmul.f32 %v57, %v48
    %v62 = vmul.f32 %v60, %v48
    %v63 = vadd.f32 %v61, 1e-05
    %v64 = vadd.f32 %v62, 1e-05
    %v65 = vrsqrt.pop %v63
    %v66 = vrsqrt.pop %v64
    %v67 = vmul.f32 %v51, %v65
    %v68 = vmul.f32 %v52, %v66
    %v69 = vld [vmem:[%s2] sm:$0x1]
    %v70 = vunpack.c.l.bf16 %v69
    %v71 = vlaneseq
    %v72 = vshrl.u32 %v71, 7
    %v73 = vsub.s32 0, %v72
    %v74 = vrot.slane %v70, %v73
    %v75 = vmul.f32 %v67, %v74
    %v76 = vmul.f32 %v68, %v74
    %v77 = vld [vmem:[%s3] sm:$0x1]
    %v78 = vunpack.c.l.bf16 %v77
    %v79 = vlaneseq
    %v80 = vshrl.u32 %v79, 7
    %v81 = vsub.s32 0, %v80
    %v82 = vrot.slane %v78, %v81
    %v83 = vadd.f32 %v75, %v82
    %v84 = vadd.f32 %v76, %v82
    %v85 = vpack.c.bf16 %v84, %v83
    %v87 = vunpack.c.l.b16 %v85
    %v88 = vunpack.c.h.b16 %v85
    %v89 = vpack.c.b16 %v87, %v87
    %v90 = vpack.c.b16 %v88, %v88
    %93 = vst.msk [vmem:[%s5] sm:$0xf] %vm38, %v89
    %94 = vst.msk [vmem:[%s5 + $0x4] sm:$0xf] %vm38, %v90
    // Predicated region
    $region18: #{gpt_pallas.26} parent=1 // pred_check
      _
    $region19: #{gpt_pallas.26} parent=1 // pred_check_branch
      %96 = sbr.rel (0) target = $region21
    $region20: #{gpt_pallas.26} parent=1 // pred_region
      %s98 = ssub.s32 128, 128
      %99 = vsyncadd [#allocation3], %s98
      %s100 = sshll.u32 [#allocation2], 4
      %s101 = int_to_ptr.vmem [resolvable:$true] %s100
      %106 = dma.vmem_to_hbm [thread:$0]  %s101, 128, %s4, [#allocation3], 64, 64, 4
    $region21: #{gpt_pallas.26} parent=1 // pred_fallthru
      _
    // Predicated region
    $region22: #{gpt_pallas.26} parent=1 // pred_check
      _
    $region23: #{gpt_pallas.26} parent=1 // pred_check_branch
      %108 = sbr.rel (0) target = $region25
    $region24: #{gpt_pallas.26} parent=1 // pred_region
      _
    $region25: #{gpt_pallas.26} parent=1 // pred_fallthru
      _
    // Predicated region
    $region26: #{gpt_pallas.26} parent=1 // pred_check
      _
    $region27: #{gpt_pallas.26} parent=1 // pred_check_branch
      %110 = sbr.rel (0) target = $region29
    $region28: #{gpt_pallas.26} parent=1 // pred_region
      %111 = dma.done [#allocation3], 128
    $region29: #{gpt_pallas.26} parent=1 // pred_fallthru
      _
    // Predicated region
    $region30: #{gpt_pallas.26} parent=1 // pred_check
      _
    $region31: #{gpt_pallas.26} parent=1 // pred_check_branch
      %113 = sbr.rel (0) target = $region33
    $region32: #{gpt_pallas.26} parent=1 // pred_region
      _
    $region33: #{gpt_pallas.26} parent=1 // pred_fallthru
      _
    %114 = vsyncpa [#allocation3], 1

// kernel: gpt_pallas.19
$region0: #{gpt_pallas.19}
  #allocation0 [shape = 'u32[]', space=smem, size = 0x4, offset = 0x4, fixed_abs, tag = 'smem constant byte address 0x4 - core index']
  #allocation1 [shape = 'u32[144,128]{1,0:T(1,128)}', space=vmem, size = 0x12000, scoped, tag = 'internal scratch']
  #allocation2 [shape = 'f32[16,32]{1,0:T(8,128)}', space=vmem, size = 0x2000, scoped, tag = 'scratch operand']
  %s0 = inlined_call_operand.vmem [shape: bf16[16,32], index: 0, kind: input, shape index: {}]
  %s1 = inlined_call_operand.vmem [shape: bf16[32,128], index: 1, kind: input, shape index: {}]
  %s2 = inlined_call_operand.vmem [shape: bf16[1,128], index: 2, kind: input, shape index: {}]
  %s3 = inlined_call_operand.vmem [shape: bf16[128,32], index: 3, kind: input, shape index: {}]
  %s4 = inlined_call_operand.vmem [shape: bf16[1,32], index: 4, kind: input, shape index: {}]
  %s5 = inlined_call_operand.vmem [shape: bf16[16,32], index: 5, kind: output, shape index: {}]
  %s6 = sld [smem:[#allocation0]]
  $region38: #{gpt_pallas.19} parent=0
    _
  %s8 = ssub.s32 1, %s6
  %s9 = scalar_select 0, %s8, %s6
  // Predicated region
  $region2: #{gpt_pallas.19} parent=0 // pred_check
    _
  $region3: #{gpt_pallas.19} parent=0 // pred_check_branch
    %11 = sbr.rel (0) target = $region5
  $region4: #{gpt_pallas.19} parent=0 // pred_region
    _
  $region5: #{gpt_pallas.19} parent=0 // pred_fallthru
    _
  // Predicated region
  $region6: #{gpt_pallas.19} parent=0 // pred_check
    _
  $region7: #{gpt_pallas.19} parent=0 // pred_check_branch
    %13 = sbr.rel (0) target = $region9
  $region8: #{gpt_pallas.19} parent=0 // pred_region
    _
  $region9: #{gpt_pallas.19} parent=0 // pred_fallthru
    _
  // Predicated region
  $region10: #{gpt_pallas.19} parent=0 // pred_check
    _
  $region11: #{gpt_pallas.19} parent=0 // pred_check_branch
    %15 = sbr.rel (0) target = $region13
  $region12: #{gpt_pallas.19} parent=0 // pred_region
    _
  $region13: #{gpt_pallas.19} parent=0 // pred_fallthru
    _
  // Predicated region
  $region14: #{gpt_pallas.19} parent=0 // pred_check
    _
  $region15: #{gpt_pallas.19} parent=0 // pred_check_branch
    %17 = sbr.rel (0) target = $region17
  $region16: #{gpt_pallas.19} parent=0 // pred_region
    _
  $region17: #{gpt_pallas.19} parent=0 // pred_fallthru
    _
  // Predicated region
  $region18: #{gpt_pallas.19} parent=0 // pred_check
    _
  $region19: #{gpt_pallas.19} parent=0 // pred_check_branch
    %19 = sbr.rel (0) target = $region21
  $region20: #{gpt_pallas.19} parent=0 // pred_region
    _
  $region21: #{gpt_pallas.19} parent=0 // pred_fallthru
    _
  %p21 = scmp.eq.s32.totalorder 0, 0
  // Predicated region
  $region22: #{gpt_pallas.19} parent=0 // pred_check
    %p22 = pneg %p21
  $region23: #{gpt_pallas.19} parent=0 // pred_check_branch
    %24 = sbr.rel (%p22) target = $region25
  $region24: #{gpt_pallas.19} parent=0 // pred_region
    %vm25 = vcmask 261120
    %26 = vst.msk [vmem:[#allocation2] sm:$0xff] %vm25, 0.0
    %27 = vst.msk [vmem:[#allocation2 + $0x8] sm:$0xff] %vm25, 0.0
  $region25: #{gpt_pallas.19} parent=0 // pred_fallthru
    _
  %v28 = vld [vmem:[%s0] sm:$0xf]
  %v29 = vld [vmem:[%s0 + $0x4] sm:$0xf]
  %v30 = vld [vmem:[%s1] sm:$0xf]
  %v31 = vld [vmem:[%s1 + $0x4] sm:$0xf]
  %v32 = vld [vmem:[%s1 + $0x8] sm:$0xf]
  %v33 = vld [vmem:[%s1 + $0xc] sm:$0xf]
  %v34 = vld [vmem:[%s2] sm:$0x1]
  %v35 = vunpack.c.l.bf16 %v34
  %v36 = vlaneseq
  %v37 = vshrl.u32 %v36, 7
  %v38 = vsub.s32 0, %v37
  %v39 = vrot.slane %v35, %v38
  %v42 = vunpack.c.l.b16 %v28
  %v43 = vunpack.c.l.b16 %v29
  %v44 = vpack.c.b16 %v43, %v42
  %v49 = vunpack.c.l.b16 %v30
  %v50 = vunpack.c.l.b16 %v31
  %v51 = vunpack.c.l.b16 %v32
  %v52 = vunpack.c.l.b16 %v33
  %v53 = vpack.c.b16 %v50, %v49
  %v54 = vpack.c.b16 %v52, %v51
  %vm57 = vcmask 261120
  %v59 = vsel %vm57, %v44, 0
  %61 = vmatprep.subr.bf16.mxu0 0
  %62 = vmatpush1.bf16.msra.mxu0 0
  %63 = vmatprep.subr.bf16.mxu0 0
  %64 = vmatpush1.bf16.msra.mxu0 0
  %65 = vmatprep.subr.bf16.mxu0 0
  %66 = vmatpush1.bf16.msra.mxu0 0
  %67 = vmatprep.subr.bf16.mxu0 0
  %68 = vmatpush1.bf16.msra.mxu0 0
  %69 = vmatprep.subr.bf16.mxu0 0
  %70 = vmatpush1.bf16.msra.mxu0 0
  %71 = vmatprep.subr.bf16.mxu0 0
  %72 = vmatpush1.bf16.msra.mxu0 0
  %73 = vmatprep.subr.bf16.mxu0 0
  %74 = vmatpush1.bf16.msra.mxu0 %v54
  %75 = vmatprep.subr.bf16.mxu0 0
  %76 = vmatpush1.bf16.msra.mxu0 %v53
  %77 = vmatprep.subr.bf16.mxu0 0
  %78 = vmatpush2.bf16.msra.mxu0 0
  %79 = vmatprep.subr.bf16.mxu0 0
  %80 = vmatpush2.bf16.msra.mxu0 0
  %81 = vmatprep.subr.bf16.mxu0 0
  %82 = vmatpush2.bf16.msra.mxu0 0
  %83 = vmatprep.subr.bf16.mxu0 0
  %84 = vmatpush2.bf16.msra.mxu0 0
  %85 = vmatprep.subr.bf16.mxu0 0
  %86 = vmatpush2.bf16.msra.mxu0 0
  %87 = vmatprep.subr.bf16.mxu0 0
  %88 = vmatpush2.bf16.msra.mxu0 0
  %89 = vmatprep.subr.bf16.mxu0 0
  %90 = vmatpush2.bf16.msra.mxu0 0
  %91 = vmatprep.subr.bf16.mxu0 0
  %92 = vmatpush2.bf16.msra.mxu0 0
  %93 = vmatprep.mubr.bf16.mxu0 0
  %94 = vmatmul.mubr.bf16.gmra.mxu0 %v59
  %v95 = vpop.f32.mrf.mxu0
  %v96 = vadd.f32 %v39, %v95
  %v97 = vpop.f32.mrf.mxu0
  %v98 = vpop.f32.mrf.mxu0
  %v99 = vadd.f32 %v39, %v98
  %v100 = vpop.f32.mrf.mxu0
  %101 = vdwg.mxu0
  %v102 = vmul.f32 %v96, 0.5
  %v103 = vmul.f32 %v99, 0.5
  %v104 = vmul.f32 %v96, 0.044715
  %v105 = vmul.f32 %v99, 0.044715
  %v106 = vmul.f32 %v104, %v96
  %v107 = vmul.f32 %v105, %v99
  %v108 = vmul.f32 %v106, %v96
  %v109 = vmul.f32 %v107, %v99
  %v110 = vadd.f32 %v96, %v108
  %v111 = vadd.f32 %v99, %v109
  %v112 = vmul.f32 %v110, 0.7978846
  %v113 = vmul.f32 %v111, 0.7978846
  %v114 = vtanh.pop %v112
  %v115 = vtanh.pop %v113
  %v116 = vadd.f32 %v114, 1.0
  %v117 = vadd.f32 %v115, 1.0
  %v118 = vmul.f32 %v102, %v116
  %v119 = vmul.f32 %v103, %v117
  %v120 = vld [vmem:[#allocation2] sm:$0xff]
  %v121 = vld [vmem:[#allocation2 + $0x8] sm:$0xff]
  %v122 = vpack.c.bf16 %v119, %v118
  %v123 = vld [vmem:[%s3] sm:$0xf]
  %v124 = vld [vmem:[%s3 + $0x4] sm:$0xf]
  %v125 = vld [vmem:[%s3 + $0x8] sm:$0xf]
  %v126 = vld [vmem:[%s3 + $0xc] sm:$0xf]
  %v127 = vld [vmem:[%s3 + $0x10] sm:$0xf]
  %v128 = vld [vmem:[%s3 + $0x14] sm:$0xf]
  %v129 = vld [vmem:[%s3 + $0x18] sm:$0xf]
  %v130 = vld [vmem:[%s3 + $0x1c] sm:$0xf]
  %v131 = vld [vmem:[%s3 + $0x20] sm:$0xf]
  %v132 = vld [vmem:[%s3 + $0x24] sm:$0xf]
  %v133 = vld [vmem:[%s3 + $0x28] sm:$0xf]
  %v134 = vld [vmem:[%s3 + $0x2c] sm:$0xf]
  %v135 = vld [vmem:[%s3 + $0x30] sm:$0xf]
  %v136 = vld [vmem:[%s3 + $0x34] sm:$0xf]
  %v137 = vld [vmem:[%s3 + $0x38] sm:$0xf]
  %v138 = vld [vmem:[%s3 + $0x3c] sm:$0xf]
  %v155 = vunpack.c.l.b16 %v123
  %v156 = vunpack.c.l.b16 %v124
  %v157 = vunpack.c.l.b16 %v125
  %v158 = vunpack.c.l.b16 %v126
  %v159 = vunpack.c.l.b16 %v127
  %v160 = vunpack.c.l.b16 %v128
  %v161 = vunpack.c.l.b16 %v129
  %v162 = vunpack.c.l.b16 %v130
  %v163 = vunpack.c.l.b16 %v131
  %v164 = vunpack.c.l.b16 %v132
  %v165 = vunpack.c.l.b16 %v133
  %v166 = vunpack.c.l.b16 %v134
  %v167 = vunpack.c.l.b16 %v135
  %v168 = vunpack.c.l.b16 %v136
  %v169 = vunpack.c.l.b16 %v137
  %v170 = vunpack.c.l.b16 %v138
  %v171 = vpack.c.b16 %v156, %v155
  %v172 = vpack.c.b16 %v158, %v157
  %v173 = vpack.c.b16 %v160, %v159
  %v174 = vpack.c.b16 %v162, %v161
  %v175 = vpack.c.b16 %v164, %v163
  %v176 = vpack.c.b16 %v166, %v165
  %v177 = vpack.c.b16 %v168, %v167
  %v178 = vpack.c.b16 %v170, %v169
  %187 = vmatprep.subr.bf16.mxu0 0
  %188 = vmatpush1.bf16.msra.mxu0 %v178
  %189 = vmatprep.subr.bf16.mxu0 0
  %190 = vmatpush1.bf16.msra.mxu0 %v177
  %191 = vmatprep.subr.bf16.mxu0 0
  %192 = vmatpush1.bf16.msra.mxu0 %v176
  %193 = vmatprep.subr.bf16.mxu0 0
  %194 = vmatpush1.bf16.msra.mxu0 %v175
  %195 = vmatprep.subr.bf16.mxu0 0
  %196 = vmatpush1.bf16.msra.mxu0 %v174
  %197 = vmatprep.subr.bf16.mxu0 0
  %198 = vmatpush1.bf16.msra.mxu0 %v173
  %199 = vmatprep.subr.bf16.mxu0 0
  %200 = vmatpush1.bf16.msra.mxu0 %v172
  %201 = vmatprep.subr.bf16.mxu0 0
  %202 = vmatpush1.bf16.msra.mxu0 %v171
  %203 = vmatprep.subr.bf16.mxu0 0
  %204 = vmatpush2.bf16.msra.mxu0 0
  %205 = vmatprep.subr.bf16.mxu0 0
  %206 = vmatpush2.bf16.msra.mxu0 0
  %207 = vmatprep.subr.bf16.mxu0 0
  %208 = vmatpush2.bf16.msra.mxu0 0
  %209 = vmatprep.subr.bf16.mxu0 0
  %210 = vmatpush2.bf16.msra.mxu0 0
  %211 = vmatprep.subr.bf16.mxu0 0
  %212 = vmatpush2.bf16.msra.mxu0 0
  %213 = vmatprep.subr.bf16.mxu0 0
  %214 = vmatpush2.bf16.msra.mxu0 0
  %215 = vmatprep.subr.bf16.mxu0 0
  %216 = vmatpush2.bf16.msra.mxu0 0
  %217 = vmatprep.subr.bf16.mxu0 0
  %218 = vmatpush2.bf16.msra.mxu0 0
  %219 = vmatprep.mubr.bf16.mxu0 0
  %220 = vmatmul.mubr.bf16.gmra.mxu0 %v122
  %v221 = vpop.f32.mrf.mxu0
  %v222 = vadd.f32 0.0, %v221
  %v223 = vpop.f32.mrf.mxu0
  %v224 = vpop.f32.mrf.mxu0
  %v225 = vadd.f32 0.0, %v224
  %v226 = vpop.f32.mrf.mxu0
  %227 = vdwg.mxu0
  %v228 = vadd.f32 %v120, %v222
  %v229 = vadd.f32 %v121, %v225
  %230 = vst.msk [vmem:[#allocation2] sm:$0xff] %vm57, %v228
  %231 = vst.msk [vmem:[#allocation2 + $0x8] sm:$0xff] %vm57, %v229
  // Predicated region
  $region26: #{gpt_pallas.19} parent=0 // pred_check
    %p232 = pneg %p21
  $region27: #{gpt_pallas.19} parent=0 // pred_check_branch
    %234 = sbr.rel (%p232) target = $region29
  $region28: #{gpt_pallas.19} parent=0 // pred_region
    %v235 = vld [vmem:[#allocation2] sm:$0xff]
    %v236 = vld [vmem:[#allocation2 + $0x8] sm:$0xff]
    %v237 = vld [vmem:[%s4] sm:$0x1]
    %v238 = vunpack.c.l.bf16 %v237
    %v239 = vlaneseq
    %v240 = vshrl.u32 %v239, 7
    %v241 = vsub.s32 0, %v240
    %v242 = vrot.slane %v238, %v241
    %v243 = vadd.f32 %v235, %v242
    %v244 = vadd.f32 %v236, %v242
    %v245 = vpack.c.bf16 %v244, %v243
    %v247 = vunpack.c.l.b16 %v245
    %v248 = vunpack.c.h.b16 %v245
    %v249 = vpack.c.b16 %v247, %v247
    %v250 = vpack.c.b16 %v248, %v248
    %vm253 = vcmask 257024
    %254 = vst.msk [vmem:[%s5] sm:$0xf] %vm253, %v249
    %255 = vst.msk [vmem:[%s5 + $0x4] sm:$0xf] %vm253, %v250
  $region29: #{gpt_pallas.19} parent=0 // pred_fallthru
    _
  // Predicated region
  $region30: #{gpt_pallas.19} parent=0 // pred_check
    _
  $region31: #{gpt_pallas.19} parent=0 // pred_check_branch
    %257 = sbr.rel (0) target = $region33
  $region32: #{gpt_pallas.19} parent=0 // pred_region
    _
  $region33: #{gpt_pallas.19} parent=0 // pred_fallthru
    _
  // Predicated region
  $region34: #{gpt_pallas.19} parent=0 // pred_check
    _
  $region35: #{gpt_pallas.19} parent=0 // pred_check_branch
    %259 = sbr.rel (0) target = $region37
  $region36: #{gpt_pallas.19} parent=0 // pred_region
    _
  $region37: #{gpt_pallas.19} parent=0 // pred_fallthru
    _

// kernel: gpt_pallas.27
$region0: #{gpt_pallas.27}
  #allocation0 [shape = 'u32[]', space=smem, size = 0x4, offset = 0x4, fixed_abs, tag = 'smem constant byte address 0x4 - core index']
  #allocation1 [shape = 'u32[144,128]{1,0:T(1,128)}', space=vmem, size = 0x12000, scoped, tag = 'internal scratch']
  #allocation2 [shape = 'f32[16,64]{1,0:T(8,128)}', space=vmem, size = 0x2000, scoped, tag = 'scratch operand']
  %s0 = inlined_call_operand.vmem [shape: bf16[16,32], index: 0, kind: input, shape index: {}]
  %s1 = inlined_call_operand.vmem [shape: bf16[64,32], index: 1, kind: input, shape index: {}]
  %s2 = inlined_call_operand.vmem [shape: bf16[1,64], index: 2, kind: input, shape index: {}]
  %s3 = inlined_call_operand.hbm [shape: f32[16,64], index: 3, kind: output, shape index: {}]
  %s4 = sld [smem:[#allocation0]]
  $region30: #{gpt_pallas.27} parent=0
    _
  %s6 = ssub.s32 1, %s4
  %s7 = scalar_select 0, %s6, %s4
  $region1: #{gpt_pallas.27} parent=0
    #allocation3 [shape = 'u8[8192]{0}', space=vmem, size = 0x2000, scoped, tag = 'output window, operand 0, single buffered']
    #allocation4 [shape = 's32[1]{0}', space=sflag, size = 0x4, scoped, tag = 'scoped memory for gpt_pallas.27']
    %8 = vsyncpa [#allocation4], 0
    // Predicated region
    $region2: #{gpt_pallas.27} parent=1 // pred_check
      _
    $region3: #{gpt_pallas.27} parent=1 // pred_check_branch
      %10 = sbr.rel (0) target = $region5
    $region4: #{gpt_pallas.27} parent=1 // pred_region
      _
    $region5: #{gpt_pallas.27} parent=1 // pred_fallthru
      _
    // Predicated region
    $region6: #{gpt_pallas.27} parent=1 // pred_check
      _
    $region7: #{gpt_pallas.27} parent=1 // pred_check_branch
      %12 = sbr.rel (0) target = $region9
    $region8: #{gpt_pallas.27} parent=1 // pred_region
      _
    $region9: #{gpt_pallas.27} parent=1 // pred_fallthru
      _
    // Predicated region
    $region10: #{gpt_pallas.27} parent=1 // pred_check
      _
    $region11: #{gpt_pallas.27} parent=1 // pred_check_branch
      %14 = sbr.rel (0) target = $region13
    $region12: #{gpt_pallas.27} parent=1 // pred_region
      _
    $region13: #{gpt_pallas.27} parent=1 // pred_fallthru
      _
    %p16 = scmp.eq.s32.totalorder 0, 0
    // Predicated region
    $region14: #{gpt_pallas.27} parent=1 // pred_check
      %p17 = pneg %p16
    $region15: #{gpt_pallas.27} parent=1 // pred_check_branch
      %19 = sbr.rel (%p17) target = $region17
    $region16: #{gpt_pallas.27} parent=1 // pred_region
      %vm20 = vcmask 523264
      %21 = vst.msk [vmem:[#allocation2] sm:$0xff] %vm20, 0.0
      %22 = vst.msk [vmem:[#allocation2 + $0x8] sm:$0xff] %vm20, 0.0
    $region17: #{gpt_pallas.27} parent=1 // pred_fallthru
      _
    %v23 = vld [vmem:[#allocation2] sm:$0xff]
    %v24 = vld [vmem:[#allocation2 + $0x8] sm:$0xff]
    %v25 = vld [vmem:[%s0] sm:$0xf]
    %v26 = vld [vmem:[%s0 + $0x4] sm:$0xf]
    %v27 = vld [vmem:[%s1] sm:$0xf]
    %v28 = vld [vmem:[%s1 + $0x4] sm:$0xf]
    %v29 = vld [vmem:[%s1 + $0x8] sm:$0xf]
    %v30 = vld [vmem:[%s1 + $0xc] sm:$0xf]
    %v31 = vld [vmem:[%s1 + $0x10] sm:$0xf]
    %v32 = vld [vmem:[%s1 + $0x14] sm:$0xf]
    %v33 = vld [vmem:[%s1 + $0x18] sm:$0xf]
    %v34 = vld [vmem:[%s1 + $0x1c] sm:$0xf]
    %v37 = vunpack.c.l.b16 %v25
    %v38 = vunpack.c.l.b16 %v26
    %v39 = vpack.c.b16 %v38, %v37
    %v48 = vunpack.c.l.b16 %v27
    %v49 = vunpack.c.l.b16 %v28
    %v50 = vunpack.c.l.b16 %v29
    %v51 = vunpack.c.l.b16 %v30
    %v52 = vunpack.c.l.b16 %v31
    %v53 = vunpack.c.l.b16 %v32
    %v54 = vunpack.c.l.b16 %v33
    %v55 = vunpack.c.l.b16 %v34
    %v56 = vpack.c.b16 %v49, %v48
    %v57 = vpack.c.b16 %v51, %v50
    %v58 = vpack.c.b16 %v53, %v52
    %v59 = vpack.c.b16 %v55, %v54
    %vm60 = vcmask 261120
    %v62 = vsel %vm60, %v39, 0
    %v65 = vsel %vm60, %v56, 0
    %v68 = vsel %vm60, %v57, 0
    %v71 = vsel %vm60, %v58, 0
    %v74 = vsel %vm60, %v59, 0
    %76 = vmatprep.subr.bf16.mxu0 0
    %77 = vmatpush1.bf16.xpose.msra.mxu0 0
    %78 = vmatprep.subr.bf16.mxu0 0
    %79 = vmatpush1.bf16.xpose.msra.mxu0 0
    %80 = vmatprep.subr.bf16.mxu0 0
    %81 = vmatpush1.bf16.xpose.msra.mxu0 0
    %82 = vmatprep.subr.bf16.mxu0 0
    %83 = vmatpush1.bf16.xpose.msra.mxu0 0
    %84 = vmatprep.subr.bf16.mxu0 0
    %85 = vmatpush1.bf16.xpose.msra.mxu0 %v74
    %86 = vmatprep.subr.bf16.mxu0 0
    %87 = vmatpush1.bf16.xpose.msra.mxu0 %v71
    %88 = vmatprep.subr.bf16.mxu0 0
    %89 = vmatpush1.bf16.xpose.msra.mxu0 %v68
    %90 = vmatprep.subr.bf16.mxu0 0
    %91 = vmatpush1.bf16.xpose.msra.mxu0 %v65
    %92 = vmatprep.subr.bf16.mxu0 0
    %93 = vmatpush2.bf16.xpose.msra.mxu0 0
    %94 = vmatprep.subr.bf16.mxu0 0
    %95 = vmatpush2.bf16.xpose.msra.mxu0 0
    %96 = vmatprep.subr.bf16.mxu0 0
    %97 = vmatpush2.bf16.xpose.msra.mxu0 0
    %98 = vmatprep.subr.bf16.mxu0 0
    %99 = vmatpush2.bf16.xpose.msra.mxu0 0
    %100 = vmatprep.subr.bf16.mxu0 0
    %101 = vmatpush2.bf16.xpose.msra.mxu0 0
    %102 = vmatprep.subr.bf16.mxu0 0
    %103 = vmatpush2.bf16.xpose.msra.mxu0 0
    %104 = vmatprep.subr.bf16.mxu0 0
    %105 = vmatpush2.bf16.xpose.msra.mxu0 0
    %106 = vmatprep.subr.bf16.mxu0 0
    %107 = vmatpush2.bf16.xpose.msra.mxu0 0
    %108 = vmatprep.mubr.bf16.mxu0 0
    %109 = vmatmul.mubr.bf16.gmra.mxu0 %v62
    %v110 = vpop.f32.mrf.mxu0
    %v111 = vadd.f32 0.0, %v110
    %v112 = vpop.f32.mrf.mxu0
    %v113 = vpop.f32.mrf.mxu0
    %v114 = vadd.f32 0.0, %v113
    %v115 = vpop.f32.mrf.mxu0
    %116 = vdwg.mxu0
    %v117 = vadd.f32 %v23, %v111
    %v118 = vadd.f32 %v24, %v114
    %vm119 = vcmask 523264
    %120 = vst.msk [vmem:[#allocation2] sm:$0xff] %vm119, %v117
    %121 = vst.msk [vmem:[#allocation2 + $0x8] sm:$0xff] %vm119, %v118
    // Predicated region
    $region18: #{gpt_pallas.27} parent=1 // pred_check
      %p122 = pneg %p16
    $region19: #{gpt_pallas.27} parent=1 // pred_check_branch
      %124 = sbr.rel (%p122) target = $region21
    $region20: #{gpt_pallas.27} parent=1 // pred_region
      %v125 = vld [vmem:[#allocation2] sm:$0xff]
      %v126 = vld [vmem:[#allocation2 + $0x8] sm:$0xff]
      %v127 = vld [vmem:[%s2] sm:$0x1]
      %v128 = vunpack.c.l.bf16 %v127
      %v129 = vlaneseq
      %v130 = vshrl.u32 %v129, 7
      %v131 = vsub.s32 0, %v130
      %v132 = vrot.slane %v128, %v131
      %v133 = vadd.f32 %v125, %v132
      %v134 = vadd.f32 %v126, %v132
      %135 = vst.msk [vmem:[#allocation3] sm:$0xff] %vm119, %v133
      %136 = vst.msk [vmem:[#allocation3 + $0x8] sm:$0xff] %vm119, %v134
    $region21: #{gpt_pallas.27} parent=1 // pred_fallthru
      _
    // Predicated region
    $region22: #{gpt_pallas.27} parent=1 // pred_check
      _
    $region23: #{gpt_pallas.27} parent=1 // pred_check_branch
      %138 = sbr.rel (0) target = $region25
    $region24: #{gpt_pallas.27} parent=1 // pred_region
      %s140 = ssub.s32 256, 256
      %141 = vsyncadd [#allocation4], %s140
      %s142 = sshll.u32 [#allocation3], 4
      %s143 = int_to_ptr.vmem [resolvable:$true] %s142
      %148 = dma.vmem_to_hbm [thread:$0]  %s143, 256, %s3, [#allocation4], 128, 128, 8
    $region25: #{gpt_pallas.27} parent=1 // pred_fallthru
      _
    // Predicated region
    $region26: #{gpt_pallas.27} parent=1 // pred_check
      _
    $region27: #{gpt_pallas.27} parent=1 // pred_check_branch
      %150 = sbr.rel (0) target = $region29
    $region28: #{gpt_pallas.27} parent=1 // pred_region
      %151 = dma.done [#allocation4], 256
    $region29: #{gpt_pallas.27} parent=1 // pred_fallthru
      _
    %152 = vsyncpa [#allocation4], 1

</llo_original>
